<compile_context>
chip_gen: v5e
topology: v5e:2x2
jax: 0.10.0
libtpu: 0.0.40
codegen_flags: <defaults>
</compile_context>

<pallas_src>
import functools

import jax
import jax.numpy as jnp
from jax.experimental import pallas as pl
from jax.experimental.pallas import tpu as pltpu


def _round_up(x, m):
    return ((x + m - 1) // m) * m


# ----------------------------------------------------------------------------
# Kernel 1: conv1 as an M-tiled matmul   out = relu(x @ w + b)
#   x tile : (tm, K) uint8 im2col rows (patch feature order (kh, kw, C))
#   w      : (K, 32) bf16, with the /256 input scale pre-folded in
#   b      : (1, 32) f32
# MXU runs bf16, epilogue (bias + ReLU) in f32, output stored bf16.
# ----------------------------------------------------------------------------
def _matmul_bias_relu_kernel(x_ref, w_ref, b_ref, o_ref):
    x = x_ref[...]
    if x.dtype == jnp.uint8:
        # uint8 -> f32 -> bf16 (0..255 exact); integer widening via f32 is the
        # known-good convert path.  Float inputs (if any) go straight to bf16,
        # so the f32 round-trip flagged in review never happens.
        x = x.astype(jnp.float32)
    acc = jnp.dot(x.astype(jnp.bfloat16), w_ref[...],
                  preferred_element_type=jnp.float32)
    acc = jnp.maximum(acc + b_ref[...], 0.0)
    # NOTE: output is 32 lanes wide (masked stores). A (tm,32)->(tm/4,128)
    # in-kernel relayout crosses the (8,128) tile; per review caveat we keep
    # the simple store (this tensor is tiny and bf16).
    o_ref[...] = acc.astype(o_ref.dtype)


def matmul_bias_relu(x, w_bf16, b_f32, *, out_dtype=jnp.bfloat16, tile_m=1024):
    """relu(x @ w + b). x:(M,K) uint8/bf16, w:(K,N) bf16, b:(N,) f32 -> (M,N)."""
    M, K = x.shape
    K2, N = w_bf16.shape
    assert K == K2, (K, K2)
    # M-tile: multiple of 32 covers u8 (32,128) and bf16 (16,128) packing.
    tm = min(int(tile_m), _round_up(M, 32))
    grid = (pl.cdiv(M, tm),)
    return pl.pallas_call(
        _matmul_bias_relu_kernel,
        out_shape=jax.ShapeDtypeStruct((M, N), out_dtype),
        grid=grid,
        in_specs=[
            pl.BlockSpec((tm, K), lambda i: (i, 0)),
            pl.BlockSpec((K, N), lambda i: (0, 0)),   # resident, fetched once
            pl.BlockSpec((1, N), lambda i: (0, 0)),
        ],
        out_specs=pl.BlockSpec((tm, N), lambda i: (i, 0)),
        compiler_params=pltpu.CompilerParams(
            dimension_semantics=("parallel",),
            vmem_limit_bytes=48 * 1024 * 1024,
        ),
    )(x, w_bf16, b_f32.reshape(1, N).astype(jnp.float32))


# ----------------------------------------------------------------------------
# Kernel 2: fused tail = conv2 + conv3 + policy/value heads, one image per
# grid step.  Input is the conv1 output in space-to-depth layout:
#   x[n, P, Q, (du*2+dv)*32 + c] = conv1_out[n, 2P+du, 2Q+dv, c]
# so conv2 (4x4 stride 2) becomes a 2x2 stride-1 conv over 128 channels and
# every slice below is contiguous and static.  All intermediates stay in VMEM.
# ----------------------------------------------------------------------------
def _tail_kernel(x_ref, c2w_ref, c2b_ref, c3w_ref, c3b_ref,
                 hw1_ref, hb1_ref, hw2_ref, hb2_ref, o_ref,
                 *, oh2, ow2, oh3, ow3):
    x = x_ref[...]                                  # (1, oh2+1, ow2+1, 128) bf16

    # ---- conv2: 2x2 stride-1 over s2d input, 128 -> 64 channels, ReLU.
    w2 = [c2w_ref[t] for t in range(4)]             # each (128, 64) bf16
    c2b = c2b_ref[...]                               # (1, 64) f32
    h2_rows = []
    for p in range(oh2):
        acc = jnp.zeros((ow2, 64), jnp.float32)
        for a in range(2):
            for b in range(2):
                lhs = x[0, p + a, b:b + ow2, :]      # (ow2, 128) bf16
                acc = acc + jnp.dot(lhs, w2[a * 2 + b],
                                    preferred_element_type=jnp.float32)
        h2_rows.append(jnp.maximum(acc + c2b, 0.0).astype(jnp.bfloat16))

    # ---- conv3: 3x3 stride-1, 64 -> 64 channels, ReLU (rows stay as values).
    w3 = [c3w_ref[t] for t in range(9)]              # each (64, 64) bf16
    c3b = c3b_ref[...]
    h3_rows = []
    for p in range(oh3):
        acc = jnp.zeros((ow3, 64), jnp.float32)
        for i in range(3):
            row = h2_rows[p + i]                     # (ow2, 64) bf16
            for j in range(3):
                acc = acc + jnp.dot(row[j:j + ow3, :], w3[i * 3 + j],
                                    preferred_element_type=jnp.float32)
        h3_rows.append(jnp.maximum(acc + c3b, 0.0).astype(jnp.bfloat16))

    # ---- heads layer 1: hidden = relu(conv_out @ [pw1|vw1] + b1) -> (1,1024).
    # Accumulated pixel-by-pixel so no in-kernel flatten/reshape is needed
    # (hw1 rows are stored in NHWC-flatten order of the conv3 output).
    hacc = jnp.zeros((1, 1024), jnp.float32)
    for p in range(oh3):
        row = h3_rows[p]
        for q in range(ow3):
            r = p * ow3 + q
            hacc = hacc + jnp.dot(row[q:q + 1, :],
                                  hw1_ref[r * 64:(r + 1) * 64, :],
                                  preferred_element_type=jnp.float32)
    hidden = jnp.maximum(hacc + hb1_ref[...], 0.0).astype(jnp.bfloat16)

    # ---- heads layer 2: block-diagonal [policy | value] packed to 128 lanes.
    out = jnp.dot(hidden, hw2_ref[...], preferred_element_type=jnp.float32)
    o_ref[0] = out + hb2_ref[...]                    # lane-dense (1, 128) store


def fused_tail(h1_s2d, params):
    """conv2 + conv3 + both heads in one kernel; grid over batch (parallel)."""
    N, s2h, s2w, _ = h1_s2d.shape
    oh2, ow2 = s2h - 1, s2w - 1
    oh3, ow3 = oh2 - 2, ow2 - 2
    k1 = params["hw1"].shape[0]
    assert k1 == oh3 * ow3 * 64, (k1, oh3, ow3)
    kernel = functools.partial(_tail_kernel, oh2=oh2, ow2=ow2, oh3=oh3, ow3=ow3)
    out = pl.pallas_call(
        kernel,
        out_shape=jax.ShapeDtypeStruct((N, 1, 128), jnp.float32),
        grid=(N,),
        in_specs=[
            pl.BlockSpec((1, s2h, s2w, 128), lambda n: (n, 0, 0, 0)),
            pl.BlockSpec((4, 128, 64), lambda n: (0, 0, 0)),    # conv2 taps
            pl.BlockSpec((1, 64), lambda n: (0, 0)),
            pl.BlockSpec((9, 64, 64), lambda n: (0, 0, 0)),     # conv3 taps
            pl.BlockSpec((1, 64), lambda n: (0, 0)),
            pl.BlockSpec((k1, 1024), lambda n: (0, 0)),         # [pw1|vw1]
            pl.BlockSpec((1, 1024), lambda n: (0, 0)),
            pl.BlockSpec((1024, 128), lambda n: (0, 0)),        # block-diag w2
            pl.BlockSpec((1, 128), lambda n: (0, 0)),
        ],
        out_specs=pl.BlockSpec((1, 1, 128), lambda n: (n, 0, 0)),
        compiler_params=pltpu.CompilerParams(
            dimension_semantics=("parallel",),
            vmem_limit_bytes=48 * 1024 * 1024,
        ),
    )(h1_s2d,
      params["c2w"], params["c2b"].reshape(1, 64),
      params["c3w"], params["c3b"].reshape(1, 64),
      params["hw1"], params["hb1"].reshape(1, 1024),
      params["hw2"], params["hb2"].reshape(1, 128))
    return out.reshape(N, 128)


# ----------------------------------------------------------------------------
# Plain-JAX glue: conv1 uint8 patch extraction (pure slicing, dtype-preserving)
# and geometry helpers.
# TODO(synk): conv1 patch extraction could also move in-kernel (review marked
#             it optional; the uint8 expansion here is small).
# ----------------------------------------------------------------------------
def conv1_im2col(x_nhwc, oh, ow):
    """uint8 patches for the 8x8 / stride-4 conv over the (oh, ow) extent.
    Row order (n, y, x); patch feature order (kh, kw, C)."""
    N, _, _, C = x_nhwc.shape
    cols = []
    for i in range(8):
        for j in range(8):
            cols.append(x_nhwc[:, i:i + 4 * oh:4, j:j + 4 * ow:4, :])
    patches = jnp.stack(cols, axis=3)                     # (N, oh, ow, 64, C)
    return patches.reshape(N * oh * ow, 64 * C)


def conv_geometry(H, W):
    oh1, ow1 = (H - 8) // 4 + 1, (W - 8) // 4 + 1
    oh2, ow2 = (oh1 - 4) // 2 + 1, (ow1 - 4) // 2 + 1
    oh3, ow3 = oh2 - 2, ow2 - 2
    assert oh1 >= 4 and ow1 >= 4 and oh3 >= 1 and ow3 >= 1, \
        "input too small for the conv stack"
    # conv1 extent actually consumed downstream (even, conv2-aligned).
    e1h, e1w = 2 * oh2 + 2, 2 * ow2 + 2
    return dict(e1h=e1h, e1w=e1w, oh2=oh2, ow2=ow2, oh3=oh3, ow3=ow3,
                conv_out_size=64 * oh3 * ow3)


# ----------------------------------------------------------------------------
# Parameter construction (deterministic, synthetic), pre-packed into the
# kernel layouts.
# Loading real PyTorch weights: Conv2d weights (OC,IC,kh,kw) must first be
# transposed to (kh,kw,IC,OC); the policy/value Linear-1 rows (which consume
# an NCHW flatten) must be permuted to NHWC-flatten order; then apply the same
# packing below (conv1: fold 1/256; conv2: space-to-depth regroup; heads:
# concat / block-diagonal pack).
# ----------------------------------------------------------------------------
def make_params(in_channels, conv_out_size, n_actions, key):
    assert n_actions + 1 <= 128
    keys = jax.random.split(key, 14)

    def w(k, shape, scale=0.05):
        return scale * jax.random.normal(k, shape, dtype=jnp.float32)

    def b(k, n, scale=0.01):
        return scale * jax.random.normal(k, (n,), dtype=jnp.float32)

    bf16 = jnp.bfloat16

    # conv1: fold the /256 input scale (2^-8, exact) and flatten (kh,kw,IC,32).
    c1w = w(keys[0], (8, 8, in_channels, 32)) * (1.0 / 256.0)
    c1w = c1w.reshape(8 * 8 * in_channels, 32).astype(bf16)
    c1b = b(keys[1], 32)

    # conv2: (4,4,32,64) regrouped for the space-to-depth input: tap (a,b) of
    # a 2x2 stride-1 conv over 128 = (du,dv,c)-packed channels.
    c2w = w(keys[2], (4, 4, 32, 64))
    c2w = (c2w.reshape(2, 2, 2, 2, 32, 64)        # (a, du, b, dv, c, oc)
              .transpose(0, 2, 1, 3, 4, 5)        # (a, b, du, dv, c, oc)
              .reshape(4, 128, 64).astype(bf16))  # tap = a*2 + b
    c2b = b(keys[3], 64)

    # conv3: (3,3,64,64) -> (9, 64, 64), tap = i*3 + j.
    c3w = w(keys[4], (3, 3, 64, 64)).reshape(9, 64, 64).astype(bf16)
    c3b = b(keys[5], 64)

    # heads layer 1: [policy | value] concatenated -> (conv_out, 1024); rows
    # in NHWC-flatten order of the conv3 output.
    pw1 = w(keys[6], (conv_out_size, 512)); pb1 = b(keys[7], 512)
    vw1 = w(keys[10], (conv_out_size, 512)); vb1 = b(keys[11], 512)
    hw1 = jnp.concatenate([pw1, vw1], axis=1).astype(bf16)
    hb1 = jnp.concatenate([pb1, vb1], axis=0)

    # heads layer 2: block-diagonal pack, zero-padded to 128 output lanes.
    pw2 = w(keys[8], (512, n_actions)); pb2 = b(keys[9], n_actions)
    vw2 = w(keys[12], (512, 1)); vb2 = b(keys[13], 1)
    hw2 = jnp.zeros((1024, 128), jnp.float32)
    hw2 = hw2.at[:512, :n_actions].set(pw2)
    hw2 = hw2.at[512:, n_actions].set(vw2[:, 0])
    hb2 = jnp.zeros((128,), jnp.float32)
    hb2 = hb2.at[:n_actions].set(pb2).at[n_actions].set(vb2[0])

    return {"c1w": c1w, "c1b": c1b, "c2w": c2w, "c2b": c2b,
            "c3w": c3w, "c3b": c3b,
            "hw1": hw1, "hb1": hb1, "hw2": hw2.astype(bf16), "hb2": hb2}


# ----------------------------------------------------------------------------
# Forward pass (== AtariA2C.forward).
# ----------------------------------------------------------------------------
def atari_a2c_forward(x_nchw, params, n_actions):
    N, C, H, W = x_nchw.shape
    g = conv_geometry(H, W)
    e1h, e1w = g["e1h"], g["e1w"]

    # Observation stays uint8 through the layout transpose and im2col; the
    # cast and the folded /256 happen against the bf16 conv1 weights in-kernel.
    x = jnp.transpose(x_nchw, (0, 2, 3, 1))                    # NHWC, uint8

    # conv1 (8x8, stride 4, ReLU) as an M-tiled matmul.  Only the e1h x e1w
    # output extent that conv2 consumes is computed (trailing rows/cols of the
    # full conv1 output never influence the heads).
    p1 = conv1_im2col(x, e1h, e1w)                             # (N*e1h*e1w, 64*C) u8
    h1 = matmul_bias_relu(p1, params["c1w"], params["c1b"])    # (N*e1h*e1w, 32) bf16

    # Space-to-depth regroup (pure layout on a tiny bf16 tensor, outside the
    # kernels): (n, y, x, c) -> (n, y//2, x//2, (y%2, x%2, c)) so conv2 is a
    # lane-dense 2x2 stride-1 conv inside the fused tail kernel.
    h1 = h1.reshape(N, e1h // 2, 2, e1w // 2, 2, 32)
    h1 = h1.transpose(0, 1, 3, 2, 4, 5).reshape(N, e1h // 2, e1w // 2, 128)

    # conv2 + conv3 + both heads, fused in one kernel (grid over batch).
    head = fused_tail(h1, params)                              # (N, 128) f32
    policy = head[:, :n_actions]
    value = head[:, n_actions:n_actions + 1]
    return policy, value


if __name__ == "__main__":
    # 40x40 input survives the 8/4, 4/2, 3/1 conv stack (40 -> 9 -> 3 -> 1),
    # giving conv_out_size = 64 * 1 * 1 = 64.
    batch, channels, spatial, n_actions = 2, 4, 40, 5

    key = jax.random.PRNGKey(0)
    k_x, k_p = jax.random.split(key)

    # uint8-style observation (forward casts to float and divides by 256).
    x = jax.random.randint(k_x, (batch, channels, spatial, spatial), 0, 256,
                           dtype=jnp.int32).astype(jnp.uint8)

    g = conv_geometry(spatial, spatial)
    params = make_params(channels, g["conv_out_size"], n_actions, k_p)

    fwd = jax.jit(atari_a2c_forward, static_argnums=2)
    policy, value = fwd(x, params, n_actions)
    policy = jax.block_until_ready(policy)
    value = jax.block_until_ready(value)

    assert policy.shape == (batch, n_actions), policy.shape
    assert value.shape == (batch, 1), value.shape
    assert policy.dtype == jnp.float32 and value.dtype == jnp.float32
    assert bool(jnp.all(jnp.isfinite(policy))) and bool(jnp.all(jnp.isfinite(value)))

    print("KERNEL_OK")
</pallas_src>

<mosaic_0001>
module attributes {stable_mosaic.version = 11 : i64} {
  func.func @_matmul_bias_relu_kernel(%arg0: i32, %arg1: memref<128x256xi8, #tpu.memory_space<vmem>>, %arg2: memref<256x32xbf16, #tpu.memory_space<vmem>>, %arg3: memref<1x32xf32, #tpu.memory_space<vmem>>, %arg4: memref<128x32xbf16, #tpu.memory_space<vmem>>) attributes {dimension_semantics = [#tpu.dimension_semantics<parallel>], iteration_bounds = array<i64: 1>, scalar_prefetch = 0 : i64, scratch_operands = 0 : i64, tpu.core_type = #tpu.core_type<tc>, window_params = [{transform_indices = @transform_0, window_bounds = array<i64: 128, 256>}, {pipeline_mode = #tpu.pipeline_mode<synchronous>, transform_indices = @transform_1, window_bounds = array<i64: 256, 32>}, {pipeline_mode = #tpu.pipeline_mode<synchronous>, transform_indices = @transform_2, window_bounds = array<i64: 1, 32>}, {transform_indices = @transform_3, window_bounds = array<i64: 128, 32>}]} {
    %c0 = arith.constant 0 : index
    %c0_0 = arith.constant 0 : index
    %0 = vector.load %arg1[%c0, %c0_0] : memref<128x256xi8, #tpu.memory_space<vmem>>, vector<128x256xi8>
    %1 = arith.uitofp %0 : vector<128x256xi8> to vector<128x256xf32>
    %2 = arith.truncf %1 : vector<128x256xf32> to vector<128x256xbf16>
    %c0_1 = arith.constant 0 : index
    %c0_2 = arith.constant 0 : index
    %3 = vector.load %arg2[%c0_1, %c0_2] : memref<256x32xbf16, #tpu.memory_space<vmem>>, vector<256x32xbf16>
    %cst = arith.constant dense<0.000000e+00> : vector<128x32xf32>
    %4 = tpu.matmul %2, %3, %cst {dimension_numbers = #tpu.dot_dimension_numbers<[1], [0], [0], [1], [0, 0, 1, 1], [], []>} : vector<128x256xbf16>, vector<256x32xbf16>, vector<128x32xf32> -> vector<128x32xf32>
    %c0_3 = arith.constant 0 : index
    %c0_4 = arith.constant 0 : index
    %5 = vector.load %arg3[%c0_3, %c0_4] : memref<1x32xf32, #tpu.memory_space<vmem>>, vector<1x32xf32>
    %6 = vector.broadcast %5 : vector<1x32xf32> to vector<128x32xf32>
    %7 = arith.addf %4, %6 : vector<128x32xf32>
    %cst_5 = arith.constant 0.000000e+00 : f32
    %8 = vector.broadcast %cst_5 : f32 to vector<128x32xf32>
    %9 = arith.maximumf %7, %8 : vector<128x32xf32>
    %10 = arith.truncf %9 : vector<128x32xf32> to vector<128x32xbf16>
    %c0_6 = arith.constant 0 : index
    %c0_7 = arith.constant 0 : index
    %11 = vector.load %arg4[%c0_6, %c0_7] : memref<128x32xbf16, #tpu.memory_space<vmem>>, vector<128x32xbf16>
    tpu.vector_store %arg4[%c0_6, %c0_7], %10 {strides = array<i32>} : memref<128x32xbf16, #tpu.memory_space<vmem>>, vector<128x32xbf16>,
    return
  }
  func.func @transform_0(%arg0: i32) -> (i32, i32) {
    %c0_i32 = arith.constant 0 : i32
    %c0_i32_0 = arith.constant 0 : i32
    return %arg0, %c0_i32 : i32, i32
  }
  func.func @transform_1(%arg0: i32) -> (i32, i32) {
    %c0_i32 = arith.constant 0 : i32
    %c0_i32_0 = arith.constant 0 : i32
    %c0_i32_1 = arith.constant 0 : i32
    return %c0_i32, %c0_i32_0 : i32, i32
  }
  func.func @transform_2(%arg0: i32) -> (i32, i32) {
    %c0_i32 = arith.constant 0 : i32
    %c0_i32_0 = arith.constant 0 : i32
    %c0_i32_1 = arith.constant 0 : i32
    return %c0_i32, %c0_i32_0 : i32, i32
  }
  func.func @transform_3(%arg0: i32) -> (i32, i32) {
    %c0_i32 = arith.constant 0 : i32
    %c0_i32_0 = arith.constant 0 : i32
    return %arg0, %c0_i32 : i32, i32
  }
}

module attributes {stable_mosaic.version = 11 : i64} {
  func.func @_tail_kernel(%arg0: i32, %arg1: memref<1x4x4x128xbf16, #tpu.memory_space<vmem>>, %arg2: memref<4x128x64xbf16, #tpu.memory_space<vmem>>, %arg3: memref<1x64xf32, #tpu.memory_space<vmem>>, %arg4: memref<9x64x64xbf16, #tpu.memory_space<vmem>>, %arg5: memref<1x64xf32, #tpu.memory_space<vmem>>, %arg6: memref<64x1024xbf16, #tpu.memory_space<vmem>>, %arg7: memref<1x1024xf32, #tpu.memory_space<vmem>>, %arg8: memref<1024x128xbf16, #tpu.memory_space<vmem>>, %arg9: memref<1x128xf32, #tpu.memory_space<vmem>>, %arg10: memref<1x1x128xf32, #tpu.memory_space<vmem>>) attributes {dimension_semantics = [#tpu.dimension_semantics<parallel>], iteration_bounds = array<i64: 2>, scalar_prefetch = 0 : i64, scratch_operands = 0 : i64, tpu.core_type = #tpu.core_type<tc>, window_params = [{transform_indices = @transform_0, window_bounds = array<i64: 1, 4, 4, 128>}, {pipeline_mode = #tpu.pipeline_mode<synchronous>, transform_indices = @transform_1, window_bounds = array<i64: 4, 128, 64>}, {pipeline_mode = #tpu.pipeline_mode<synchronous>, transform_indices = @transform_2, window_bounds = array<i64: 1, 64>}, {pipeline_mode = #tpu.pipeline_mode<synchronous>, transform_indices = @transform_3, window_bounds = array<i64: 9, 64, 64>}, {pipeline_mode = #tpu.pipeline_mode<synchronous>, transform_indices = @transform_4, window_bounds = array<i64: 1, 64>}, {pipeline_mode = #tpu.pipeline_mode<synchronous>, transform_indices = @transform_5, window_bounds = array<i64: 64, 1024>}, {pipeline_mode = #tpu.pipeline_mode<synchronous>, transform_indices = @transform_6, window_bounds = array<i64: 1, 1024>}, {pipeline_mode = #tpu.pipeline_mode<synchronous>, transform_indices = @transform_7, window_bounds = array<i64: 1024, 128>}, {pipeline_mode = #tpu.pipeline_mode<synchronous>, transform_indices = @transform_8, window_bounds = array<i64: 1, 128>}, {transform_indices = @transform_9, window_bounds = array<i64: 1, 1, 128>}]} {
    %c0 = arith.constant 0 : index
    %c0_0 = arith.constant 0 : index
    %c0_1 = arith.constant 0 : index
    %c0_2 = arith.constant 0 : index
    %0 = vector.load %arg1[%c0, %c0_0, %c0_1, %c0_2] : memref<1x4x4x128xbf16, #tpu.memory_space<vmem>>, vector<1x4x4x128xbf16>
    %c0_3 = arith.constant 0 : index
    %c0_4 = arith.constant 0 : index
    %c0_5 = arith.constant 0 : index
    %1 = vector.load %arg2[%c0_3, %c0_4, %c0_5] : memref<4x128x64xbf16, #tpu.memory_space<vmem>>, vector<1x128x64xbf16>
    %2 = vector.shape_cast %1 : vector<1x128x64xbf16> to vector<128x64xbf16>
    %c1 = arith.constant 1 : index
    %c0_6 = arith.constant 0 : index
    %c0_7 = arith.constant 0 : index
    %3 = vector.load %arg2[%c1, %c0_6, %c0_7] : memref<4x128x64xbf16, #tpu.memory_space<vmem>>, vector<1x128x64xbf16>
    %4 = vector.shape_cast %3 : vector<1x128x64xbf16> to vector<128x64xbf16>
    %c2 = arith.constant 2 : index
    %c0_8 = arith.constant 0 : index
    %c0_9 = arith.constant 0 : index
    %5 = vector.load %arg2[%c2, %c0_8, %c0_9] : memref<4x128x64xbf16, #tpu.memory_space<vmem>>, vector<1x128x64xbf16>
    %6 = vector.shape_cast %5 : vector<1x128x64xbf16> to vector<128x64xbf16>
    %c3 = arith.constant 3 : index
    %c0_10 = arith.constant 0 : index
    %c0_11 = arith.constant 0 : index
    %7 = vector.load %arg2[%c3, %c0_10, %c0_11] : memref<4x128x64xbf16, #tpu.memory_space<vmem>>, vector<1x128x64xbf16>
    %8 = vector.shape_cast %7 : vector<1x128x64xbf16> to vector<128x64xbf16>
    %c0_12 = arith.constant 0 : index
    %c0_13 = arith.constant 0 : index
    %9 = vector.load %arg3[%c0_12, %c0_13] : memref<1x64xf32, #tpu.memory_space<vmem>>, vector<1x64xf32>
    %cst = arith.constant 0.000000e+00 : f32
    %10 = vector.broadcast %cst : f32 to vector<3x64xf32>
    %11 = vector.extract_strided_slice %0 {offsets = [0, 0, 0, 0], sizes = [1, 1, 3, 128], strides = [1, 1, 1, 1]} : vector<1x4x4x128xbf16> to vector<1x1x3x128xbf16>
    %12 = vector.shape_cast %11 : vector<1x1x3x128xbf16> to vector<3x128xbf16>
    %cst_14 = arith.constant dense<0.000000e+00> : vector<3x64xf32>
    %13 = tpu.matmul %12, %2, %cst_14 {dimension_numbers = #tpu.dot_dimension_numbers<[1], [0], [0], [1], [0, 0, 1, 1], [], []>} : vector<3x128xbf16>, vector<128x64xbf16>, vector<3x64xf32> -> vector<3x64xf32>
    %14 = arith.addf %10, %13 : vector<3x64xf32>
    %15 = vector.extract_strided_slice %0 {offsets = [0, 0, 1, 0], sizes = [1, 1, 3, 128], strides = [1, 1, 1, 1]} : vector<1x4x4x128xbf16> to vector<1x1x3x128xbf16>
    %16 = vector.shape_cast %15 : vector<1x1x3x128xbf16> to vector<3x128xbf16>
    %cst_15 = arith.constant dense<0.000000e+00> : vector<3x64xf32>
    %17 = tpu.matmul %16, %4, %cst_15 {dimension_numbers = #tpu.dot_dimension_numbers<[1], [0], [0], [1], [0, 0, 1, 1], [], []>} : vector<3x128xbf16>, vector<128x64xbf16>, vector<3x64xf32> -> vector<3x64xf32>
    %18 = arith.addf %14, %17 : vector<3x64xf32>
    %19 = vector.extract_strided_slice %0 {offsets = [0, 1, 0, 0], sizes = [1, 1, 3, 128], strides = [1, 1, 1, 1]} : vector<1x4x4x128xbf16> to vector<1x1x3x128xbf16>
    %20 = vector.shape_cast %19 : vector<1x1x3x128xbf16> to vector<3x128xbf16>
    %cst_16 = arith.constant dense<0.000000e+00> : vector<3x64xf32>
    %21 = tpu.matmul %20, %6, %cst_16 {dimension_numbers = #tpu.dot_dimension_numbers<[1], [0], [0], [1], [0, 0, 1, 1], [], []>} : vector<3x128xbf16>, vector<128x64xbf16>, vector<3x64xf32> -> vector<3x64xf32>
    %22 = arith.addf %18, %21 : vector<3x64xf32>
    %23 = vector.extract_strided_slice %0 {offsets = [0, 1, 1, 0], sizes = [1, 1, 3, 128], strides = [1, 1, 1, 1]} : vector<1x4x4x128xbf16> to vector<1x1x3x128xbf16>
    %24 = vector.shape_cast %23 : vector<1x1x3x128xbf16> to vector<3x128xbf16>
    %cst_17 = arith.constant dense<0.000000e+00> : vector<3x64xf32>
    %25 = tpu.matmul %24, %8, %cst_17 {dimension_numbers = #tpu.dot_dimension_numbers<[1], [0], [0], [1], [0, 0, 1, 1], [], []>} : vector<3x128xbf16>, vector<128x64xbf16>, vector<3x64xf32> -> vector<3x64xf32>
    %26 = arith.addf %22, %25 : vector<3x64xf32>
    %27 = vector.broadcast %9 : vector<1x64xf32> to vector<3x64xf32>
    %28 = arith.addf %26, %27 : vector<3x64xf32>
    %cst_18 = arith.constant 0.000000e+00 : f32
    %29 = vector.broadcast %cst_18 : f32 to vector<3x64xf32>
    %30 = arith.maximumf %28, %29 : vector<3x64xf32>
    %31 = arith.truncf %30 : vector<3x64xf32> to vector<3x64xbf16>
    %cst_19 = arith.constant 0.000000e+00 : f32
    %32 = vector.broadcast %cst_19 : f32 to vector<3x64xf32>
    %33 = vector.extract_strided_slice %0 {offsets = [0, 1, 0, 0], sizes = [1, 1, 3, 128], strides = [1, 1, 1, 1]} : vector<1x4x4x128xbf16> to vector<1x1x3x128xbf16>
    %34 = vector.shape_cast %33 : vector<1x1x3x128xbf16> to vector<3x128xbf16>
    %cst_20 = arith.constant dense<0.000000e+00> : vector<3x64xf32>
    %35 = tpu.matmul %34, %2, %cst_20 {dimension_numbers = #tpu.dot_dimension_numbers<[1], [0], [0], [1], [0, 0, 1, 1], [], []>} : vector<3x128xbf16>, vector<128x64xbf16>, vector<3x64xf32> -> vector<3x64xf32>
    %36 = arith.addf %32, %35 : vector<3x64xf32>
    %37 = vector.extract_strided_slice %0 {offsets = [0, 1, 1, 0], sizes = [1, 1, 3, 128], strides = [1, 1, 1, 1]} : vector<1x4x4x128xbf16> to vector<1x1x3x128xbf16>
    %38 = vector.shape_cast %37 : vector<1x1x3x128xbf16> to vector<3x128xbf16>
    %cst_21 = arith.constant dense<0.000000e+00> : vector<3x64xf32>
    %39 = tpu.matmul %38, %4, %cst_21 {dimension_numbers = #tpu.dot_dimension_numbers<[1], [0], [0], [1], [0, 0, 1, 1], [], []>} : vector<3x128xbf16>, vector<128x64xbf16>, vector<3x64xf32> -> vector<3x64xf32>
    %40 = arith.addf %36, %39 : vector<3x64xf32>
    %41 = vector.extract_strided_slice %0 {offsets = [0, 2, 0, 0], sizes = [1, 1, 3, 128], strides = [1, 1, 1, 1]} : vector<1x4x4x128xbf16> to vector<1x1x3x128xbf16>
    %42 = vector.shape_cast %41 : vector<1x1x3x128xbf16> to vector<3x128xbf16>
    %cst_22 = arith.constant dense<0.000000e+00> : vector<3x64xf32>
    %43 = tpu.matmul %42, %6, %cst_22 {dimension_numbers = #tpu.dot_dimension_numbers<[1], [0], [0], [1], [0, 0, 1, 1], [], []>} : vector<3x128xbf16>, vector<128x64xbf16>, vector<3x64xf32> -> vector<3x64xf32>
    %44 = arith.addf %40, %43 : vector<3x64xf32>
    %45 = vector.extract_strided_slice %0 {offsets = [0, 2, 1, 0], sizes = [1, 1, 3, 128], strides = [1, 1, 1, 1]} : vector<1x4x4x128xbf16> to vector<1x1x3x128xbf16>
    %46 = vector.shape_cast %45 : vector<1x1x3x128xbf16> to vector<3x128xbf16>
    %cst_23 = arith.constant dense<0.000000e+00> : vector<3x64xf32>
    %47 = tpu.matmul %46, %8, %cst_23 {dimension_numbers = #tpu.dot_dimension_numbers<[1], [0], [0], [1], [0, 0, 1, 1], [], []>} : vector<3x128xbf16>, vector<128x64xbf16>, vector<3x64xf32> -> vector<3x64xf32>
    %48 = arith.addf %44, %47 : vector<3x64xf32>
    %49 = vector.broadcast %9 : vector<1x64xf32> to vector<3x64xf32>
    %50 = arith.addf %48, %49 : vector<3x64xf32>
    %cst_24 = arith.constant 0.000000e+00 : f32
    %51 = vector.broadcast %cst_24 : f32 to vector<3x64xf32>
    %52 = arith.maximumf %50, %51 : vector<3x64xf32>
    %53 = arith.truncf %52 : vector<3x64xf32> to vector<3x64xbf16>
    %cst_25 = arith.constant 0.000000e+00 : f32
    %54 = vector.broadcast %cst_25 : f32 to vector<3x64xf32>
    %55 = vector.extract_strided_slice %0 {offsets = [0, 2, 0, 0], sizes = [1, 1, 3, 128], strides = [1, 1, 1, 1]} : vector<1x4x4x128xbf16> to vector<1x1x3x128xbf16>
    %56 = vector.shape_cast %55 : vector<1x1x3x128xbf16> to vector<3x128xbf16>
    %cst_26 = arith.constant dense<0.000000e+00> : vector<3x64xf32>
    %57 = tpu.matmul %56, %2, %cst_26 {dimension_numbers = #tpu.dot_dimension_numbers<[1], [0], [0], [1], [0, 0, 1, 1], [], []>} : vector<3x128xbf16>, vector<128x64xbf16>, vector<3x64xf32> -> vector<3x64xf32>
    %58 = arith.addf %54, %57 : vector<3x64xf32>
    %59 = vector.extract_strided_slice %0 {offsets = [0, 2, 1, 0], sizes = [1, 1, 3, 128], strides = [1, 1, 1, 1]} : vector<1x4x4x128xbf16> to vector<1x1x3x128xbf16>
    %60 = vector.shape_cast %59 : vector<1x1x3x128xbf16> to vector<3x128xbf16>
    %cst_27 = arith.constant dense<0.000000e+00> : vector<3x64xf32>
    %61 = tpu.matmul %60, %4, %cst_27 {dimension_numbers = #tpu.dot_dimension_numbers<[1], [0], [0], [1], [0, 0, 1, 1], [], []>} : vector<3x128xbf16>, vector<128x64xbf16>, vector<3x64xf32> -> vector<3x64xf32>
    %62 = arith.addf %58, %61 : vector<3x64xf32>
    %63 = vector.extract_strided_slice %0 {offsets = [0, 3, 0, 0], sizes = [1, 1, 3, 128], strides = [1, 1, 1, 1]} : vector<1x4x4x128xbf16> to vector<1x1x3x128xbf16>
    %64 = vector.shape_cast %63 : vector<1x1x3x128xbf16> to vector<3x128xbf16>
    %cst_28 = arith.constant dense<0.000000e+00> : vector<3x64xf32>
    %65 = tpu.matmul %64, %6, %cst_28 {dimension_numbers = #tpu.dot_dimension_numbers<[1], [0], [0], [1], [0, 0, 1, 1], [], []>} : vector<3x128xbf16>, vector<128x64xbf16>, vector<3x64xf32> -> vector<3x64xf32>
    %66 = arith.addf %62, %65 : vector<3x64xf32>
    %67 = vector.extract_strided_slice %0 {offsets = [0, 3, 1, 0], sizes = [1, 1, 3, 128], strides = [1, 1, 1, 1]} : vector<1x4x4x128xbf16> to vector<1x1x3x128xbf16>
    %68 = vector.shape_cast %67 : vector<1x1x3x128xbf16> to vector<3x128xbf16>
    %cst_29 = arith.constant dense<0.000000e+00> : vector<3x64xf32>
    %69 = tpu.matmul %68, %8, %cst_29 {dimension_numbers = #tpu.dot_dimension_numbers<[1], [0], [0], [1], [0, 0, 1, 1], [], []>} : vector<3x128xbf16>, vector<128x64xbf16>, vector<3x64xf32> -> vector<3x64xf32>
    %70 = arith.addf %66, %69 : vector<3x64xf32>
    %71 = vector.broadcast %9 : vector<1x64xf32> to vector<3x64xf32>
    %72 = arith.addf %70, %71 : vector<3x64xf32>
    %cst_30 = arith.constant 0.000000e+00 : f32
    %73 = vector.broadcast %cst_30 : f32 to vector<3x64xf32>
    %74 = arith.maximumf %72, %73 : vector<3x64xf32>
    %75 = arith.truncf %74 : vector<3x64xf32> to vector<3x64xbf16>
    %c0_31 = arith.constant 0 : index
    %c0_32 = arith.constant 0 : index
    %c0_33 = arith.constant 0 : index
    %76 = vector.load %arg4[%c0_31, %c0_32, %c0_33] : memref<9x64x64xbf16, #tpu.memory_space<vmem>>, vector<1x64x64xbf16>
    %77 = vector.shape_cast %76 : vector<1x64x64xbf16> to vector<64x64xbf16>
    %c1_34 = arith.constant 1 : index
    %c0_35 = arith.constant 0 : index
    %c0_36 = arith.constant 0 : index
    %78 = vector.load %arg4[%c1_34, %c0_35, %c0_36] : memref<9x64x64xbf16, #tpu.memory_space<vmem>>, vector<1x64x64xbf16>
    %79 = vector.shape_cast %78 : vector<1x64x64xbf16> to vector<64x64xbf16>
    %c2_37 = arith.constant 2 : index
    %c0_38 = arith.constant 0 : index
    %c0_39 = arith.constant 0 : index
    %80 = vector.load %arg4[%c2_37, %c0_38, %c0_39] : memref<9x64x64xbf16, #tpu.memory_space<vmem>>, vector<1x64x64xbf16>
    %81 = vector.shape_cast %80 : vector<1x64x64xbf16> to vector<64x64xbf16>
    %c3_40 = arith.constant 3 : index
    %c0_41 = arith.constant 0 : index
    %c0_42 = arith.constant 0 : index
    %82 = vector.load %arg4[%c3_40, %c0_41, %c0_42] : memref<9x64x64xbf16, #tpu.memory_space<vmem>>, vector<1x64x64xbf16>
    %83 = vector.shape_cast %82 : vector<1x64x64xbf16> to vector<64x64xbf16>
    %c4 = arith.constant 4 : index
    %c0_43 = arith.constant 0 : index
    %c0_44 = arith.constant 0 : index
    %84 = vector.load %arg4[%c4, %c0_43, %c0_44] : memref<9x64x64xbf16, #tpu.memory_space<vmem>>, vector<1x64x64xbf16>
    %85 = vector.shape_cast %84 : vector<1x64x64xbf16> to vector<64x64xbf16>
    %c5 = arith.constant 5 : index
    %c0_45 = arith.constant 0 : index
    %c0_46 = arith.constant 0 : index
    %86 = vector.load %arg4[%c5, %c0_45, %c0_46] : memref<9x64x64xbf16, #tpu.memory_space<vmem>>, vector<1x64x64xbf16>
    %87 = vector.shape_cast %86 : vector<1x64x64xbf16> to vector<64x64xbf16>
    %c6 = arith.constant 6 : index
    %c0_47 = arith.constant 0 : index
    %c0_48 = arith.constant 0 : index
    %88 = vector.load %arg4[%c6, %c0_47, %c0_48] : memref<9x64x64xbf16, #tpu.memory_space<vmem>>, vector<1x64x64xbf16>
    %89 = vector.shape_cast %88 : vector<1x64x64xbf16> to vector<64x64xbf16>
    %c7 = arith.constant 7 : index
    %c0_49 = arith.constant 0 : index
    %c0_50 = arith.constant 0 : index
    %90 = vector.load %arg4[%c7, %c0_49, %c0_50] : memref<9x64x64xbf16, #tpu.memory_space<vmem>>, vector<1x64x64xbf16>
    %91 = vector.shape_cast %90 : vector<1x64x64xbf16> to vector<64x64xbf16>
    %c8 = arith.constant 8 : index
    %c0_51 = arith.constant 0 : index
    %c0_52 = arith.constant 0 : index
    %92 = vector.load %arg4[%c8, %c0_51, %c0_52] : memref<9x64x64xbf16, #tpu.memory_space<vmem>>, vector<1x64x64xbf16>
    %93 = vector.shape_cast %92 : vector<1x64x64xbf16> to vector<64x64xbf16>
    %c0_53 = arith.constant 0 : index
    %c0_54 = arith.constant 0 : index
    %94 = vector.load %arg5[%c0_53, %c0_54] : memref<1x64xf32, #tpu.memory_space<vmem>>, vector<1x64xf32>
    %cst_55 = arith.constant 0.000000e+00 : f32
    %95 = vector.broadcast %cst_55 : f32 to vector<1x64xf32>
    %96 = vector.extract_strided_slice %31 {offsets = [0, 0], sizes = [1, 64], strides = [1, 1]} : vector<3x64xbf16> to vector<1x64xbf16>
    %cst_56 = arith.constant dense<0.000000e+00> : vector<1x64xf32>
    %97 = tpu.matmul %96, %77, %cst_56 {dimension_numbers = #tpu.dot_dimension_numbers<[1], [0], [0], [1], [0, 0, 1, 1], [], []>} : vector<1x64xbf16>, vector<64x64xbf16>, vector<1x64xf32> -> vector<1x64xf32>
    %98 = arith.addf %95, %97 : vector<1x64xf32>
    %99 = vector.extract_strided_slice %31 {offsets = [1, 0], sizes = [1, 64], strides = [1, 1]} : vector<3x64xbf16> to vector<1x64xbf16>
    %cst_57 = arith.constant dense<0.000000e+00> : vector<1x64xf32>
    %100 = tpu.matmul %99, %79, %cst_57 {dimension_numbers = #tpu.dot_dimension_numbers<[1], [0], [0], [1], [0, 0, 1, 1], [], []>} : vector<1x64xbf16>, vector<64x64xbf16>, vector<1x64xf32> -> vector<1x64xf32>
    %101 = arith.addf %98, %100 : vector<1x64xf32>
    %102 = vector.extract_strided_slice %31 {offsets = [2, 0], sizes = [1, 64], strides = [1, 1]} : vector<3x64xbf16> to vector<1x64xbf16>
    %cst_58 = arith.constant dense<0.000000e+00> : vector<1x64xf32>
    %103 = tpu.matmul %102, %81, %cst_58 {dimension_numbers = #tpu.dot_dimension_numbers<[1], [0], [0], [1], [0, 0, 1, 1], [], []>} : vector<1x64xbf16>, vector<64x64xbf16>, vector<1x64xf32> -> vector<1x64xf32>
    %104 = arith.addf %101, %103 : vector<1x64xf32>
    %105 = vector.extract_strided_slice %53 {offsets = [0, 0], sizes = [1, 64], strides = [1, 1]} : vector<3x64xbf16> to vector<1x64xbf16>
    %cst_59 = arith.constant dense<0.000000e+00> : vector<1x64xf32>
    %106 = tpu.matmul %105, %83, %cst_59 {dimension_numbers = #tpu.dot_dimension_numbers<[1], [0], [0], [1], [0, 0, 1, 1], [], []>} : vector<1x64xbf16>, vector<64x64xbf16>, vector<1x64xf32> -> vector<1x64xf32>
    %107 = arith.addf %104, %106 : vector<1x64xf32>
    %108 = vector.extract_strided_slice %53 {offsets = [1, 0], sizes = [1, 64], strides = [1, 1]} : vector<3x64xbf16> to vector<1x64xbf16>
    %cst_60 = arith.constant dense<0.000000e+00> : vector<1x64xf32>
    %109 = tpu.matmul %108, %85, %cst_60 {dimension_numbers = #tpu.dot_dimension_numbers<[1], [0], [0], [1], [0, 0, 1, 1], [], []>} : vector<1x64xbf16>, vector<64x64xbf16>, vector<1x64xf32> -> vector<1x64xf32>
    %110 = arith.addf %107, %109 : vector<1x64xf32>
    %111 = vector.extract_strided_slice %53 {offsets = [2, 0], sizes = [1, 64], strides = [1, 1]} : vector<3x64xbf16> to vector<1x64xbf16>
    %cst_61 = arith.constant dense<0.000000e+00> : vector<1x64xf32>
    %112 = tpu.matmul %111, %87, %cst_61 {dimension_numbers = #tpu.dot_dimension_numbers<[1], [0], [0], [1], [0, 0, 1, 1], [], []>} : vector<1x64xbf16>, vector<64x64xbf16>, vector<1x64xf32> -> vector<1x64xf32>
    %113 = arith.addf %110, %112 : vector<1x64xf32>
    %114 = vector.extract_strided_slice %75 {offsets = [0, 0], sizes = [1, 64], strides = [1, 1]} : vector<3x64xbf16> to vector<1x64xbf16>
    %cst_62 = arith.constant dense<0.000000e+00> : vector<1x64xf32>
    %115 = tpu.matmul %114, %89, %cst_62 {dimension_numbers = #tpu.dot_dimension_numbers<[1], [0], [0], [1], [0, 0, 1, 1], [], []>} : vector<1x64xbf16>, vector<64x64xbf16>, vector<1x64xf32> -> vector<1x64xf32>
    %116 = arith.addf %113, %115 : vector<1x64xf32>
    %117 = vector.extract_strided_slice %75 {offsets = [1, 0], sizes = [1, 64], strides = [1, 1]} : vector<3x64xbf16> to vector<1x64xbf16>
    %cst_63 = arith.constant dense<0.000000e+00> : vector<1x64xf32>
    %118 = tpu.matmul %117, %91, %cst_63 {dimension_numbers = #tpu.dot_dimension_numbers<[1], [0], [0], [1], [0, 0, 1, 1], [], []>} : vector<1x64xbf16>, vector<64x64xbf16>, vector<1x64xf32> -> vector<1x64xf32>
    %119 = arith.addf %116, %118 : vector<1x64xf32>
    %120 = vector.extract_strided_slice %75 {offsets = [2, 0], sizes = [1, 64], strides = [1, 1]} : vector<3x64xbf16> to vector<1x64xbf16>
    %cst_64 = arith.constant dense<0.000000e+00> : vector<1x64xf32>
    %121 = tpu.matmul %120, %93, %cst_64 {dimension_numbers = #tpu.dot_dimension_numbers<[1], [0], [0], [1], [0, 0, 1, 1], [], []>} : vector<1x64xbf16>, vector<64x64xbf16>, vector<1x64xf32> -> vector<1x64xf32>
    %122 = arith.addf %119, %121 : vector<1x64xf32>
    %123 = arith.addf %122, %94 : vector<1x64xf32>
    %cst_65 = arith.constant 0.000000e+00 : f32
    %124 = vector.broadcast %cst_65 : f32 to vector<1x64xf32>
    %125 = arith.maximumf %123, %124 : vector<1x64xf32>
    %126 = arith.truncf %125 : vector<1x64xf32> to vector<1x64xbf16>
    %cst_66 = arith.constant 0.000000e+00 : f32
    %127 = vector.broadcast %cst_66 : f32 to vector<1x1024xf32>
    %c0_67 = arith.constant 0 : index
    %c0_68 = arith.constant 0 : index
    %128 = vector.load %arg6[%c0_67, %c0_68] : memref<64x1024xbf16, #tpu.memory_space<vmem>>, vector<64x1024xbf16>
    %cst_69 = arith.constant dense<0.000000e+00> : vector<1x1024xf32>
    %129 = tpu.matmul %126, %128, %cst_69 {dimension_numbers = #tpu.dot_dimension_numbers<[1], [0], [0], [1], [0, 0, 1, 1], [], []>} : vector<1x64xbf16>, vector<64x1024xbf16>, vector<1x1024xf32> -> vector<1x1024xf32>
    %130 = arith.addf %127, %129 : vector<1x1024xf32>
    %c0_70 = arith.constant 0 : index
    %c0_71 = arith.constant 0 : index
    %131 = vector.load %arg7[%c0_70, %c0_71] : memref<1x1024xf32, #tpu.memory_space<vmem>>, vector<1x1024xf32>
    %132 = arith.addf %130, %131 : vector<1x1024xf32>
    %cst_72 = arith.constant 0.000000e+00 : f32
    %133 = vector.broadcast %cst_72 : f32 to vector<1x1024xf32>
    %134 = arith.maximumf %132, %133 : vector<1x1024xf32>
    %135 = arith.truncf %134 : vector<1x1024xf32> to vector<1x1024xbf16>
    %c0_73 = arith.constant 0 : index
    %c0_74 = arith.constant 0 : index
    %136 = vector.load %arg8[%c0_73, %c0_74] : memref<1024x128xbf16, #tpu.memory_space<vmem>>, vector<1024x128xbf16>
    %cst_75 = arith.constant dense<0.000000e+00> : vector<1x128xf32>
    %137 = tpu.matmul %135, %136, %cst_75 {dimension_numbers = #tpu.dot_dimension_numbers<[1], [0], [0], [1], [0, 0, 1, 1], [], []>} : vector<1x1024xbf16>, vector<1024x128xbf16>, vector<1x128xf32> -> vector<1x128xf32>
    %c0_76 = arith.constant 0 : index
    %c0_77 = arith.constant 0 : index
    %138 = vector.load %arg9[%c0_76, %c0_77] : memref<1x128xf32, #tpu.memory_space<vmem>>, vector<1x128xf32>
    %139 = arith.addf %137, %138 : vector<1x128xf32>
    %c0_78 = arith.constant 0 : index
    %c0_79 = arith.constant 0 : index
    %c0_80 = arith.constant 0 : index
    %140 = vector.load %arg10[%c0_78, %c0_79, %c0_80] : memref<1x1x128xf32, #tpu.memory_space<vmem>>, vector<1x1x128xf32>
    %141 = vector.shape_cast %140 : vector<1x1x128xf32> to vector<1x128xf32>
    %142 = vector.shape_cast %139 : vector<1x128xf32> to vector<1x1x128xf32>
    tpu.vector_store %arg10[%c0_78, %c0_79, %c0_80], %142 {strides = array<i32>} : memref<1x1x128xf32, #tpu.memory_space<vmem>>, vector<1x1x128xf32>,
    return
  }
  func.func @transform_0(%arg0: i32) -> (i32, i32, i32, i32) {
    %c0_i32 = arith.constant 0 : i32
    %c0_i32_0 = arith.constant 0 : i32
    %c0_i32_1 = arith.constant 0 : i32
    %c0_i32_2 = arith.constant 0 : i32
    return %arg0, %c0_i32, %c0_i32_0, %c0_i32_1 : i32, i32, i32, i32
  }
  func.func @transform_1(%arg0: i32) -> (i32, i32, i32) {
    %c0_i32 = arith.constant 0 : i32
    %c0_i32_0 = arith.constant 0 : i32
    %c0_i32_1 = arith.constant 0 : i32
    %c0_i32_2 = arith.constant 0 : i32
    return %c0_i32, %c0_i32_0, %c0_i32_1 : i32, i32, i32
  }
  func.func @transform_2(%arg0: i32) -> (i32, i32) {
    %c0_i32 = arith.constant 0 : i32
    %c0_i32_0 = arith.constant 0 : i32
    %c0_i32_1 = arith.constant 0 : i32
    return %c0_i32, %c0_i32_0 : i32, i32
  }
  func.func @transform_3(%arg0: i32) -> (i32, i32, i32) {
    %c0_i32 = arith.constant 0 : i32
    %c0_i32_0 = arith.constant 0 : i32
    %c0_i32_1 = arith.constant 0 : i32
    %c0_i32_2 = arith.constant 0 : i32
    return %c0_i32, %c0_i32_0, %c0_i32_1 : i32, i32, i32
  }
  func.func @transform_4(%arg0: i32) -> (i32, i32) {
    %c0_i32 = arith.constant 0 : i32
    %c0_i32_0 = arith.constant 0 : i32
    %c0_i32_1 = arith.constant 0 : i32
    return %c0_i32, %c0_i32_0 : i32, i32
  }
  func.func @transform_5(%arg0: i32) -> (i32, i32) {
    %c0_i32 = arith.constant 0 : i32
    %c0_i32_0 = arith.constant 0 : i32
    %c0_i32_1 = arith.constant 0 : i32
    return %c0_i32, %c0_i32_0 : i32, i32
  }
  func.func @transform_6(%arg0: i32) -> (i32, i32) {
    %c0_i32 = arith.constant 0 : i32
    %c0_i32_0 = arith.constant 0 : i32
    %c0_i32_1 = arith.constant 0 : i32
    return %c0_i32, %c0_i32_0 : i32, i32
  }
  func.func @transform_7(%arg0: i32) -> (i32, i32) {
    %c0_i32 = arith.constant 0 : i32
    %c0_i32_0 = arith.constant 0 : i32
    %c0_i32_1 = arith.constant 0 : i32
    return %c0_i32, %c0_i32_0 : i32, i32
  }
  func.func @transform_8(%arg0: i32) -> (i32, i32) {
    %c0_i32 = arith.constant 0 : i32
    %c0_i32_0 = arith.constant 0 : i32
    %c0_i32_1 = arith.constant 0 : i32
    return %c0_i32, %c0_i32_0 : i32, i32
  }
  func.func @transform_9(%arg0: i32) -> (i32, i32, i32) {
    %c0_i32 = arith.constant 0 : i32
    %c0_i32_0 = arith.constant 0 : i32
    %c0_i32_1 = arith.constant 0 : i32
    return %arg0, %c0_i32, %c0_i32_0 : i32, i32, i32
  }
}

</mosaic_0001>

<llo_original>
// kernel: atari_a2c_forward.2
$region0: #{atari_a2c_forward.2}
  #allocation0 [shape = 'u32[]', space=smem, size = 0x4, offset = 0x4, fixed_abs, tag = 'smem constant byte address 0x4 - core index']
  #allocation1 [shape = 'u32[72,128]{1,0:T(1,128)}', space=vmem, size = 0x9000, scoped, tag = 'internal scratch']
  %s0 = inlined_call_operand.vmem [shape: u8[128,256], index: 0, kind: input, shape index: {}]
  %s1 = inlined_call_operand.vmem [shape: bf16[256,32], index: 1, kind: input, shape index: {}]
  %s2 = inlined_call_operand.vmem [shape: f32[1,32], index: 2, kind: input, shape index: {}]
  %s3 = inlined_call_operand.vmem [shape: bf16[128,32], index: 3, kind: output, shape index: {}]
  %s4 = sld [smem:[#allocation0]]
  $region22: #{atari_a2c_forward.2} parent=0
    _
  %s6 = ssub.s32 1, %s4
  %s7 = scalar_select 0, %s6, %s4
  // Predicated region
  $region2: #{atari_a2c_forward.2} parent=0 // pred_check
    _
  $region3: #{atari_a2c_forward.2} parent=0 // pred_check_branch
    %9 = sbr.rel (0) target = $region5
  $region4: #{atari_a2c_forward.2} parent=0 // pred_region
    _
  $region5: #{atari_a2c_forward.2} parent=0 // pred_fallthru
    _
  // Predicated region
  $region6: #{atari_a2c_forward.2} parent=0 // pred_check
    _
  $region7: #{atari_a2c_forward.2} parent=0 // pred_check_branch
    %11 = sbr.rel (0) target = $region9
  $region8: #{atari_a2c_forward.2} parent=0 // pred_region
    _
  $region9: #{atari_a2c_forward.2} parent=0 // pred_fallthru
    _
  // Predicated region
  $region10: #{atari_a2c_forward.2} parent=0 // pred_check
    _
  $region11: #{atari_a2c_forward.2} parent=0 // pred_check_branch
    %13 = sbr.rel (0) target = $region13
  $region12: #{atari_a2c_forward.2} parent=0 // pred_region
    _
  $region13: #{atari_a2c_forward.2} parent=0 // pred_fallthru
    _
  %v14 = vld [vmem:[%s0] sm:$0xff]
  %v15 = vld [vmem:[%s0 + $0x8] sm:$0xff]
  %v16 = vld [vmem:[%s0 + $0x10] sm:$0xff]
  %v17 = vld [vmem:[%s0 + $0x18] sm:$0xff]
  %v18 = vld [vmem:[%s0 + $0x20] sm:$0xff]
  %v19 = vld [vmem:[%s0 + $0x28] sm:$0xff]
  %v20 = vld [vmem:[%s0 + $0x30] sm:$0xff]
  %v21 = vld [vmem:[%s0 + $0x38] sm:$0xff]
  %v22 = vunpack.c.0.s8 %v14
  %v23 = vunpack.c.0.s8 %v15
  %v24 = vunpack.c.1.s8 %v14
  %v25 = vunpack.c.1.s8 %v15
  %v26 = vunpack.c.2.s8 %v14
  %v27 = vunpack.c.2.s8 %v15
  %v28 = vunpack.c.3.s8 %v14
  %v29 = vunpack.c.3.s8 %v15
  %v30 = vunpack.c.0.s8 %v16
  %v31 = vunpack.c.0.s8 %v17
  %v32 = vunpack.c.1.s8 %v16
  %v33 = vunpack.c.1.s8 %v17
  %v34 = vunpack.c.2.s8 %v16
  %v35 = vunpack.c.2.s8 %v17
  %v36 = vunpack.c.3.s8 %v16
  %v37 = vunpack.c.3.s8 %v17
  %v38 = vunpack.c.0.s8 %v18
  %v39 = vunpack.c.0.s8 %v19
  %v40 = vunpack.c.1.s8 %v18
  %v41 = vunpack.c.1.s8 %v19
  %v42 = vunpack.c.2.s8 %v18
  %v43 = vunpack.c.2.s8 %v19
  %v44 = vunpack.c.3.s8 %v18
  %v45 = vunpack.c.3.s8 %v19
  %v46 = vunpack.c.0.s8 %v20
  %v47 = vunpack.c.0.s8 %v21
  %v48 = vunpack.c.1.s8 %v20
  %v49 = vunpack.c.1.s8 %v21
  %v50 = vunpack.c.2.s8 %v20
  %v51 = vunpack.c.2.s8 %v21
  %v52 = vunpack.c.3.s8 %v20
  %v53 = vunpack.c.3.s8 %v21
  %v54 = vand.u32 %v22, 255
  %v55 = vand.u32 %v23, 255
  %v56 = vand.u32 %v24, 255
  %v57 = vand.u32 %v25, 255
  %v58 = vand.u32 %v26, 255
  %v59 = vand.u32 %v27, 255
  %v60 = vand.u32 %v28, 255
  %v61 = vand.u32 %v29, 255
  %v62 = vand.u32 %v30, 255
  %v63 = vand.u32 %v31, 255
  %v64 = vand.u32 %v32, 255
  %v65 = vand.u32 %v33, 255
  %v66 = vand.u32 %v34, 255
  %v67 = vand.u32 %v35, 255
  %v68 = vand.u32 %v36, 255
  %v69 = vand.u32 %v37, 255
  %v70 = vand.u32 %v38, 255
  %v71 = vand.u32 %v39, 255
  %v72 = vand.u32 %v40, 255
  %v73 = vand.u32 %v41, 255
  %v74 = vand.u32 %v42, 255
  %v75 = vand.u32 %v43, 255
  %v76 = vand.u32 %v44, 255
  %v77 = vand.u32 %v45, 255
  %v78 = vand.u32 %v46, 255
  %v79 = vand.u32 %v47, 255
  %v80 = vand.u32 %v48, 255
  %v81 = vand.u32 %v49, 255
  %v82 = vand.u32 %v50, 255
  %v83 = vand.u32 %v51, 255
  %v84 = vand.u32 %v52, 255
  %v85 = vand.u32 %v53, 255
  %v86 = vcvt.s32.f32 %v54
  %v87 = vcvt.s32.f32 %v55
  %v88 = vcvt.s32.f32 %v56
  %v89 = vcvt.s32.f32 %v57
  %v90 = vcvt.s32.f32 %v58
  %v91 = vcvt.s32.f32 %v59
  %v92 = vcvt.s32.f32 %v60
  %v93 = vcvt.s32.f32 %v61
  %v94 = vcvt.s32.f32 %v62
  %v95 = vcvt.s32.f32 %v63
  %v96 = vcvt.s32.f32 %v64
  %v97 = vcvt.s32.f32 %v65
  %v98 = vcvt.s32.f32 %v66
  %v99 = vcvt.s32.f32 %v67
  %v100 = vcvt.s32.f32 %v68
  %v101 = vcvt.s32.f32 %v69
  %v102 = vcvt.s32.f32 %v70
  %v103 = vcvt.s32.f32 %v71
  %v104 = vcvt.s32.f32 %v72
  %v105 = vcvt.s32.f32 %v73
  %v106 = vcvt.s32.f32 %v74
  %v107 = vcvt.s32.f32 %v75
  %v108 = vcvt.s32.f32 %v76
  %v109 = vcvt.s32.f32 %v77
  %v110 = vcvt.s32.f32 %v78
  %v111 = vcvt.s32.f32 %v79
  %v112 = vcvt.s32.f32 %v80
  %v113 = vcvt.s32.f32 %v81
  %v114 = vcvt.s32.f32 %v82
  %v115 = vcvt.s32.f32 %v83
  %v116 = vcvt.s32.f32 %v84
  %v117 = vcvt.s32.f32 %v85
  %v118 = vpack.c.bf16 %v88, %v86
  %v119 = vpack.c.bf16 %v89, %v87
  %v120 = vpack.c.bf16 %v92, %v90
  %v121 = vpack.c.bf16 %v93, %v91
  %v122 = vpack.c.bf16 %v96, %v94
  %v123 = vpack.c.bf16 %v97, %v95
  %v124 = vpack.c.bf16 %v100, %v98
  %v125 = vpack.c.bf16 %v101, %v99
  %v126 = vpack.c.bf16 %v104, %v102
  %v127 = vpack.c.bf16 %v105, %v103
  %v128 = vpack.c.bf16 %v108, %v106
  %v129 = vpack.c.bf16 %v109, %v107
  %v130 = vpack.c.bf16 %v112, %v110
  %v131 = vpack.c.bf16 %v113, %v111
  %v132 = vpack.c.bf16 %v116, %v114
  %v133 = vpack.c.bf16 %v117, %v115
  %v134 = vld [vmem:[%s1] sm:$0xf]
  %v135 = vld [vmem:[%s1 + $0x4] sm:$0xf]
  %v136 = vld [vmem:[%s1 + $0x8] sm:$0xf]
  %v137 = vld [vmem:[%s1 + $0xc] sm:$0xf]
  %v138 = vld [vmem:[%s1 + $0x10] sm:$0xf]
  %v139 = vld [vmem:[%s1 + $0x14] sm:$0xf]
  %v140 = vld [vmem:[%s1 + $0x18] sm:$0xf]
  %v141 = vld [vmem:[%s1 + $0x1c] sm:$0xf]
  %v142 = vld [vmem:[%s1 + $0x20] sm:$0xf]
  %v143 = vld [vmem:[%s1 + $0x24] sm:$0xf]
  %v144 = vld [vmem:[%s1 + $0x28] sm:$0xf]
  %v145 = vld [vmem:[%s1 + $0x2c] sm:$0xf]
  %v146 = vld [vmem:[%s1 + $0x30] sm:$0xf]
  %v147 = vld [vmem:[%s1 + $0x34] sm:$0xf]
  %v148 = vld [vmem:[%s1 + $0x38] sm:$0xf]
  %v149 = vld [vmem:[%s1 + $0x3c] sm:$0xf]
  %v150 = vld [vmem:[%s1 + $0x40] sm:$0xf]
  %v151 = vld [vmem:[%s1 + $0x44] sm:$0xf]
  %v152 = vld [vmem:[%s1 + $0x48] sm:$0xf]
  %v153 = vld [vmem:[%s1 + $0x4c] sm:$0xf]
  %v154 = vld [vmem:[%s1 + $0x50] sm:$0xf]
  %v155 = vld [vmem:[%s1 + $0x54] sm:$0xf]
  %v156 = vld [vmem:[%s1 + $0x58] sm:$0xf]
  %v157 = vld [vmem:[%s1 + $0x5c] sm:$0xf]
  %v158 = vld [vmem:[%s1 + $0x60] sm:$0xf]
  %v159 = vld [vmem:[%s1 + $0x64] sm:$0xf]
  %v160 = vld [vmem:[%s1 + $0x68] sm:$0xf]
  %v161 = vld [vmem:[%s1 + $0x6c] sm:$0xf]
  %v162 = vld [vmem:[%s1 + $0x70] sm:$0xf]
  %v163 = vld [vmem:[%s1 + $0x74] sm:$0xf]
  %v164 = vld [vmem:[%s1 + $0x78] sm:$0xf]
  %v165 = vld [vmem:[%s1 + $0x7c] sm:$0xf]
  %v166 = vld [vmem:[%s2] sm:$0x1]
  %v168 = vperm.slane %v166, 0
  %v202 = vunpack.c.l.b16 %v134
  %v203 = vunpack.c.l.b16 %v135
  %v204 = vunpack.c.l.b16 %v136
  %v205 = vunpack.c.l.b16 %v137
  %v206 = vunpack.c.l.b16 %v138
  %v207 = vunpack.c.l.b16 %v139
  %v208 = vunpack.c.l.b16 %v140
  %v209 = vunpack.c.l.b16 %v141
  %v210 = vunpack.c.l.b16 %v142
  %v211 = vunpack.c.l.b16 %v143
  %v212 = vunpack.c.l.b16 %v144
  %v213 = vunpack.c.l.b16 %v145
  %v214 = vunpack.c.l.b16 %v146
  %v215 = vunpack.c.l.b16 %v147
  %v216 = vunpack.c.l.b16 %v148
  %v217 = vunpack.c.l.b16 %v149
  %v218 = vunpack.c.l.b16 %v150
  %v219 = vunpack.c.l.b16 %v151
  %v220 = vunpack.c.l.b16 %v152
  %v221 = vunpack.c.l.b16 %v153
  %v222 = vunpack.c.l.b16 %v154
  %v223 = vunpack.c.l.b16 %v155
  %v224 = vunpack.c.l.b16 %v156
  %v225 = vunpack.c.l.b16 %v157
  %v226 = vunpack.c.l.b16 %v158
  %v227 = vunpack.c.l.b16 %v159
  %v228 = vunpack.c.l.b16 %v160
  %v229 = vunpack.c.l.b16 %v161
  %v230 = vunpack.c.l.b16 %v162
  %v231 = vunpack.c.l.b16 %v163
  %v232 = vunpack.c.l.b16 %v164
  %v233 = vunpack.c.l.b16 %v165
  %v234 = vpack.c.b16 %v203, %v202
  %v235 = vpack.c.b16 %v205, %v204
  %v236 = vpack.c.b16 %v207, %v206
  %v237 = vpack.c.b16 %v209, %v208
  %v238 = vpack.c.b16 %v211, %v210
  %v239 = vpack.c.b16 %v213, %v212
  %v240 = vpack.c.b16 %v215, %v214
  %v241 = vpack.c.b16 %v217, %v216
  %v242 = vpack.c.b16 %v219, %v218
  %v243 = vpack.c.b16 %v221, %v220
  %v244 = vpack.c.b16 %v223, %v222
  %v245 = vpack.c.b16 %v225, %v224
  %v246 = vpack.c.b16 %v227, %v226
  %v247 = vpack.c.b16 %v229, %v228
  %v248 = vpack.c.b16 %v231, %v230
  %v249 = vpack.c.b16 %v233, %v232
  %266 = vmatpush.bf16.msra.mxu0 %v241
  %267 = vmatpush.bf16.msra.mxu0 %v240
  %268 = vmatpush.bf16.msra.mxu0 %v239
  %269 = vmatpush.bf16.msra.mxu0 %v238
  %270 = vmatpush.bf16.msra.mxu0 %v237
  %271 = vmatpush.bf16.msra.mxu0 %v236
  %272 = vmatpush.bf16.msra.mxu0 %v235
  %273 = vmatpush.bf16.msra.mxu0 %v234
  %274 = vmatmul.bf16.gmra.mxu0 %v118
  %v275 = vpop.f32.mrf.mxu0
  %v276 = vadd.f32 %v168, %v275
  %v277 = vpop.f32.mrf.mxu0
  %v278 = vadd.f32 %v168, %v277
  %279 = vmatmul.bf16.gmra.mxu0 %v120
  %v280 = vpop.f32.mrf.mxu0
  %v281 = vadd.f32 %v168, %v280
  %v282 = vpop.f32.mrf.mxu0
  %v283 = vadd.f32 %v168, %v282
  %284 = vmatmul.bf16.gmra.mxu0 %v122
  %v285 = vpop.f32.mrf.mxu0
  %v286 = vadd.f32 %v168, %v285
  %v287 = vpop.f32.mrf.mxu0
  %v288 = vadd.f32 %v168, %v287
  %289 = vmatmul.bf16.gmra.mxu0 %v124
  %v290 = vpop.f32.mrf.mxu0
  %v291 = vadd.f32 %v168, %v290
  %v292 = vpop.f32.mrf.mxu0
  %v293 = vadd.f32 %v168, %v292
  %294 = vmatmul.bf16.gmra.mxu0 %v126
  %v295 = vpop.f32.mrf.mxu0
  %v296 = vadd.f32 %v168, %v295
  %v297 = vpop.f32.mrf.mxu0
  %v298 = vadd.f32 %v168, %v297
  %299 = vmatmul.bf16.gmra.mxu0 %v128
  %v300 = vpop.f32.mrf.mxu0
  %v301 = vadd.f32 %v168, %v300
  %v302 = vpop.f32.mrf.mxu0
  %v303 = vadd.f32 %v168, %v302
  %304 = vmatmul.bf16.gmra.mxu0 %v130
  %v305 = vpop.f32.mrf.mxu0
  %v306 = vadd.f32 %v168, %v305
  %v307 = vpop.f32.mrf.mxu0
  %v308 = vadd.f32 %v168, %v307
  %309 = vmatmul.bf16.gmra.mxu0 %v132
  %v310 = vpop.f32.mrf.mxu0
  %v311 = vadd.f32 %v168, %v310
  %v312 = vpop.f32.mrf.mxu0
  %v313 = vadd.f32 %v168, %v312
  %314 = vdwg.mxu0
  %315 = vmatpush.bf16.msra.mxu0 %v249
  %316 = vmatpush.bf16.msra.mxu0 %v248
  %317 = vmatpush.bf16.msra.mxu0 %v247
  %318 = vmatpush.bf16.msra.mxu0 %v246
  %319 = vmatpush.bf16.msra.mxu0 %v245
  %320 = vmatpush.bf16.msra.mxu0 %v244
  %321 = vmatpush.bf16.msra.mxu0 %v243
  %322 = vmatpush.bf16.msra.mxu0 %v242
  %323 = vmatmul.bf16.gmra.mxu0 %v119
  %v324 = vpop.f32.mrf.mxu0
  %v325 = vadd.f32 %v276, %v324
  %v326 = vpop.f32.mrf.mxu0
  %v327 = vadd.f32 %v278, %v326
  %328 = vmatmul.bf16.gmra.mxu0 %v121
  %v329 = vpop.f32.mrf.mxu0
  %v330 = vadd.f32 %v281, %v329
  %v331 = vpop.f32.mrf.mxu0
  %v332 = vadd.f32 %v283, %v331
  %333 = vmatmul.bf16.gmra.mxu0 %v123
  %v334 = vpop.f32.mrf.mxu0
  %v335 = vadd.f32 %v286, %v334
  %v336 = vpop.f32.mrf.mxu0
  %v337 = vadd.f32 %v288, %v336
  %338 = vmatmul.bf16.gmra.mxu0 %v125
  %v339 = vpop.f32.mrf.mxu0
  %v340 = vadd.f32 %v291, %v339
  %v341 = vpop.f32.mrf.mxu0
  %v342 = vadd.f32 %v293, %v341
  %343 = vmatmul.bf16.gmra.mxu0 %v127
  %v344 = vpop.f32.mrf.mxu0
  %v345 = vadd.f32 %v296, %v344
  %v346 = vpop.f32.mrf.mxu0
  %v347 = vadd.f32 %v298, %v346
  %348 = vmatmul.bf16.gmra.mxu0 %v129
  %v349 = vpop.f32.mrf.mxu0
  %v350 = vadd.f32 %v301, %v349
  %v351 = vpop.f32.mrf.mxu0
  %v352 = vadd.f32 %v303, %v351
  %353 = vmatmul.bf16.gmra.mxu0 %v131
  %v354 = vpop.f32.mrf.mxu0
  %v355 = vadd.f32 %v306, %v354
  %v356 = vpop.f32.mrf.mxu0
  %v357 = vadd.f32 %v308, %v356
  %358 = vmatmul.bf16.gmra.mxu0 %v133
  %v359 = vpop.f32.mrf.mxu0
  %v360 = vadd.f32 %v311, %v359
  %v361 = vpop.f32.mrf.mxu0
  %v362 = vadd.f32 %v313, %v361
  %363 = vdwg.mxu0
  %v364 = vmax.f32 %v325, 0.0
  %v365 = vmax.f32 %v327, 0.0
  %v366 = vmax.f32 %v330, 0.0
  %v367 = vmax.f32 %v332, 0.0
  %v368 = vmax.f32 %v335, 0.0
  %v369 = vmax.f32 %v337, 0.0
  %v370 = vmax.f32 %v340, 0.0
  %v371 = vmax.f32 %v342, 0.0
  %v372 = vmax.f32 %v345, 0.0
  %v373 = vmax.f32 %v347, 0.0
  %v374 = vmax.f32 %v350, 0.0
  %v375 = vmax.f32 %v352, 0.0
  %v376 = vmax.f32 %v355, 0.0
  %v377 = vmax.f32 %v357, 0.0
  %v378 = vmax.f32 %v360, 0.0
  %v379 = vmax.f32 %v362, 0.0
  %v380 = vpack.c.bf16 %v364, %v364
  %v381 = vpack.c.bf16 %v365, %v365
  %v382 = vpack.c.bf16 %v366, %v366
  %v383 = vpack.c.bf16 %v367, %v367
  %v384 = vpack.c.bf16 %v368, %v368
  %v385 = vpack.c.bf16 %v369, %v369
  %v386 = vpack.c.bf16 %v370, %v370
  %v387 = vpack.c.bf16 %v371, %v371
  %v388 = vpack.c.bf16 %v372, %v372
  %v389 = vpack.c.bf16 %v373, %v373
  %v390 = vpack.c.bf16 %v374, %v374
  %v391 = vpack.c.bf16 %v375, %v375
  %v392 = vpack.c.bf16 %v376, %v376
  %v393 = vpack.c.bf16 %v377, %v377
  %v394 = vpack.c.bf16 %v378, %v378
  %v395 = vpack.c.bf16 %v379, %v379
  %vm396 = vcmask 257024
  %397 = vst.msk [vmem:[%s3] sm:$0xf] %vm396, %v380
  %398 = vst.msk [vmem:[%s3 + $0x4] sm:$0xf] %vm396, %v381
  %399 = vst.msk [vmem:[%s3 + $0x8] sm:$0xf] %vm396, %v382
  %400 = vst.msk [vmem:[%s3 + $0xc] sm:$0xf] %vm396, %v383
  %401 = vst.msk [vmem:[%s3 + $0x10] sm:$0xf] %vm396, %v384
  %402 = vst.msk [vmem:[%s3 + $0x14] sm:$0xf] %vm396, %v385
  %403 = vst.msk [vmem:[%s3 + $0x18] sm:$0xf] %vm396, %v386
  %404 = vst.msk [vmem:[%s3 + $0x1c] sm:$0xf] %vm396, %v387
  %405 = vst.msk [vmem:[%s3 + $0x20] sm:$0xf] %vm396, %v388
  %406 = vst.msk [vmem:[%s3 + $0x24] sm:$0xf] %vm396, %v389
  %407 = vst.msk [vmem:[%s3 + $0x28] sm:$0xf] %vm396, %v390
  %408 = vst.msk [vmem:[%s3 + $0x2c] sm:$0xf] %vm396, %v391
  %409 = vst.msk [vmem:[%s3 + $0x30] sm:$0xf] %vm396, %v392
  %410 = vst.msk [vmem:[%s3 + $0x34] sm:$0xf] %vm396, %v393
  %411 = vst.msk [vmem:[%s3 + $0x38] sm:$0xf] %vm396, %v394
  %412 = vst.msk [vmem:[%s3 + $0x3c] sm:$0xf] %vm396, %v395
  // Predicated region
  $region14: #{atari_a2c_forward.2} parent=0 // pred_check
    _
  $region15: #{atari_a2c_forward.2} parent=0 // pred_check_branch
    %414 = sbr.rel (0) target = $region17
  $region16: #{atari_a2c_forward.2} parent=0 // pred_region
    _
  $region17: #{atari_a2c_forward.2} parent=0 // pred_fallthru
    _
  // Predicated region
  $region18: #{atari_a2c_forward.2} parent=0 // pred_check
    _
  $region19: #{atari_a2c_forward.2} parent=0 // pred_check_branch
    %416 = sbr.rel (0) target = $region21
  $region20: #{atari_a2c_forward.2} parent=0 // pred_region
    _
  $region21: #{atari_a2c_forward.2} parent=0 // pred_fallthru
    _

// kernel: atari_a2c_forward.3
$region0: #{atari_a2c_forward.3}
  #allocation0 [shape = 'u32[]', space=smem, size = 0x4, offset = 0x4, fixed_abs, tag = 'smem constant byte address 0x4 - core index']
  #allocation1 [shape = 'u32[72,128]{1,0:T(1,128)}', space=vmem, size = 0x9000, scoped, tag = 'internal scratch']
  %s0 = inlined_call_operand.vmem [shape: bf16[2,4,4,128], index: 0, kind: input, shape index: {}]
  %s1 = inlined_call_operand.vmem [shape: bf16[4,128,64], index: 1, kind: input, shape index: {}]
  %s2 = inlined_call_operand.vmem [shape: f32[1,64], index: 2, kind: input, shape index: {}]
  %s3 = inlined_call_operand.vmem [shape: bf16[9,64,64], index: 3, kind: input, shape index: {}]
  %s4 = inlined_call_operand.vmem [shape: f32[1,64], index: 4, kind: input, shape index: {}]
  %s5 = inlined_call_operand.vmem [shape: bf16[64,1024], index: 5, kind: input, shape index: {}]
  %s6 = inlined_call_operand.vmem [shape: f32[1,1024], index: 6, kind: input, shape index: {}]
  %s7 = inlined_call_operand.vmem [shape: bf16[1024,128], index: 7, kind: input, shape index: {}]
  %s8 = inlined_call_operand.vmem [shape: f32[1,128], index: 8, kind: input, shape index: {}]
  %s9 = inlined_call_operand.vmem [shape: f32[2,1,128], index: 9, kind: output, shape index: {}]
  %s10 = sld [smem:[#allocation0]]
  $region69: #{atari_a2c_forward.3} parent=0
    _
  %s12 = ssub.s32 1, %s10
  %s13 = scalar_select 0, %s12, %s10
  loop: start=0, step=1, limit=4
  $region2: #{atari_a2c_forward.3} parent=0 // loop_pre_header
    _
  $region3: #{atari_a2c_forward.3} parent=0 // loop_header
    %s15 = sphi 0, %s19
    %p16 = scmp.ge.s32.totalorder %s15, 4
    %s25 = sphi 0, %s27
    %s28 = sphi 0, %s25
    %s29 = sphi 0, %s28
    %s45 = sphi 0, %s29
    %s49 = sphi 0, %s49
    %s51 = sphi 0, %s49
    %s52 = sphi 0, %s51
    %s66 = sphi 0, %s52
    %s70 = sphi 0, %s70
    %s72 = sphi 0, %s70
    %s73 = sphi 0, %s72
    %s87 = sphi 0, %s73
    %s91 = sphi 0, %s91
    %s93 = sphi 0, %s91
    %s94 = sphi 0, %s93
    %s108 = sphi 0, %s94
    %s112 = sphi 0, %s112
    %s114 = sphi 0, %s112
    %s115 = sphi 0, %s114
    %s129 = sphi 0, %s115
    %s133 = sphi 0, %s133
    %s135 = sphi 0, %s133
    %s136 = sphi 0, %s135
    %s150 = sphi 0, %s136
    %s154 = sphi 0, %s154
    %s156 = sphi 0, %s154
    %s157 = sphi 0, %s156
    %s171 = sphi 0, %s157
    %s175 = sphi 0, %s175
    %s177 = sphi 0, %s175
    %s178 = sphi 0, %s177
    %s192 = sphi 0, %s178
    %s196 = sphi 0, %s196
    %s198 = sphi 0, %s196
    %s199 = sphi 0, %s198
    %s213 = sphi 0, %s199
    %s219 = sphi 0, %s221
    %s222 = sphi 0, %s219
    %s223 = sphi 0, %s222
    %s239 = sphi 0, %s223
  $region4: #{atari_a2c_forward.3} parent=0 // loop_header_branch
    %18 = sbr.rel (%p16) target = $region8
  $region5: #{atari_a2c_forward.3} parent=0 // loop_body
    %s20 = ssub.s32 %s15, 1
    %s21 = ssub.s32 %s15, 2
    %s22 = sadd.s32 %s15, 1
    %s23 = ssub.s32 %s15, %s22
    %p24 = scmp.eq.s32.totalorder %s23, 0
    %s26 = sadd.s32 %s25, 1
    %s27 = scalar_select %p24, %s25, %s26
    %p30 = pneg %p24
    %p31 = scmp.eq.s32.totalorder %s15, 1
    %p32 = por %p30, %p31
    %p33 = scmp.ne.s32.totalorder %s25, %s28
    %p34 = scmp.eq.s32.totalorder %s15, 0
    %p35 = por %p33, %p34
    %p36 = scmp.ne.s32.totalorder %s25, %s28
    %p37 = scmp.eq.s32.totalorder %s20, 1
    %p38 = por %p36, %p37
    %p39 = scmp.ne.s32.totalorder %s28, %s29
    %p40 = scmp.eq.s32.totalorder %s20, 0
    %p41 = por %p39, %p40
    %p42 = scmp.ne.s32.totalorder %s28, %s29
    %p43 = scmp.eq.s32.totalorder %s21, 1
    %p44 = por %p42, %p43
    %p46 = scmp.ne.s32.totalorder %s29, %s45
    %p47 = scmp.eq.s32.totalorder %s21, 0
    %p48 = por %p46, %p47
    %s50 = sadd.s32 %s49, 1
    %p53 = scmp.eq.s32.totalorder %s15, 1
    %p54 = scmp.ne.s32.totalorder %s49, %s51
    %p55 = scmp.eq.s32.totalorder %s15, 0
    %p56 = por %p54, %p55
    %p57 = scmp.ne.s32.totalorder %s49, %s51
    %p58 = scmp.eq.s32.totalorder %s20, 1
    %p59 = por %p57, %p58
    %p60 = scmp.ne.s32.totalorder %s51, %s52
    %p61 = scmp.eq.s32.totalorder %s20, 0
    %p62 = por %p60, %p61
    %p63 = scmp.ne.s32.totalorder %s51, %s52
    %p64 = scmp.eq.s32.totalorder %s21, 1
    %p65 = por %p63, %p64
    %p67 = scmp.ne.s32.totalorder %s52, %s66
    %p68 = scmp.eq.s32.totalorder %s21, 0
    %p69 = por %p67, %p68
    %s71 = sadd.s32 %s70, 1
    %p74 = scmp.eq.s32.totalorder %s15, 1
    %p75 = scmp.ne.s32.totalorder %s70, %s72
    %p76 = scmp.eq.s32.totalorder %s15, 0
    %p77 = por %p75, %p76
    %p78 = scmp.ne.s32.totalorder %s70, %s72
    %p79 = scmp.eq.s32.totalorder %s20, 1
    %p80 = por %p78, %p79
    %p81 = scmp.ne.s32.totalorder %s72, %s73
    %p82 = scmp.eq.s32.totalorder %s20, 0
    %p83 = por %p81, %p82
    %p84 = scmp.ne.s32.totalorder %s72, %s73
    %p85 = scmp.eq.s32.totalorder %s21, 1
    %p86 = por %p84, %p85
    %p88 = scmp.ne.s32.totalorder %s73, %s87
    %p89 = scmp.eq.s32.totalorder %s21, 0
    %p90 = por %p88, %p89
    %s92 = sadd.s32 %s91, 1
    %p95 = scmp.eq.s32.totalorder %s15, 1
    %p96 = scmp.ne.s32.totalorder %s91, %s93
    %p97 = scmp.eq.s32.totalorder %s15, 0
    %p98 = por %p96, %p97
    %p99 = scmp.ne.s32.totalorder %s91, %s93
    %p100 = scmp.eq.s32.totalorder %s20, 1
    %p101 = por %p99, %p100
    %p102 = scmp.ne.s32.totalorder %s93, %s94
    %p103 = scmp.eq.s32.totalorder %s20, 0
    %p104 = por %p102, %p103
    %p105 = scmp.ne.s32.totalorder %s93, %s94
    %p106 = scmp.eq.s32.totalorder %s21, 1
    %p107 = por %p105, %p106
    %p109 = scmp.ne.s32.totalorder %s94, %s108
    %p110 = scmp.eq.s32.totalorder %s21, 0
    %p111 = por %p109, %p110
    %s113 = sadd.s32 %s112, 1
    %p116 = scmp.eq.s32.totalorder %s15, 1
    %p117 = scmp.ne.s32.totalorder %s112, %s114
    %p118 = scmp.eq.s32.totalorder %s15, 0
    %p119 = por %p117, %p118
    %p120 = scmp.ne.s32.totalorder %s112, %s114
    %p121 = scmp.eq.s32.totalorder %s20, 1
    %p122 = por %p120, %p121
    %p123 = scmp.ne.s32.totalorder %s114, %s115
    %p124 = scmp.eq.s32.totalorder %s20, 0
    %p125 = por %p123, %p124
    %p126 = scmp.ne.s32.totalorder %s114, %s115
    %p127 = scmp.eq.s32.totalorder %s21, 1
    %p128 = por %p126, %p127
    %p130 = scmp.ne.s32.totalorder %s115, %s129
    %p131 = scmp.eq.s32.totalorder %s21, 0
    %p132 = por %p130, %p131
    %s134 = sadd.s32 %s133, 1
    %p137 = scmp.eq.s32.totalorder %s15, 1
    %p138 = scmp.ne.s32.totalorder %s133, %s135
    %p139 = scmp.eq.s32.totalorder %s15, 0
    %p140 = por %p138, %p139
    %p141 = scmp.ne.s32.totalorder %s133, %s135
    %p142 = scmp.eq.s32.totalorder %s20, 1
    %p143 = por %p141, %p142
    %p144 = scmp.ne.s32.totalorder %s135, %s136
    %p145 = scmp.eq.s32.totalorder %s20, 0
    %p146 = por %p144, %p145
    %p147 = scmp.ne.s32.totalorder %s135, %s136
    %p148 = scmp.eq.s32.totalorder %s21, 1
    %p149 = por %p147, %p148
    %p151 = scmp.ne.s32.totalorder %s136, %s150
    %p152 = scmp.eq.s32.totalorder %s21, 0
    %p153 = por %p151, %p152
    %s155 = sadd.s32 %s154, 1
    %p158 = scmp.eq.s32.totalorder %s15, 1
    %p159 = scmp.ne.s32.totalorder %s154, %s156
    %p160 = scmp.eq.s32.totalorder %s15, 0
    %p161 = por %p159, %p160
    %p162 = scmp.ne.s32.totalorder %s154, %s156
    %p163 = scmp.eq.s32.totalorder %s20, 1
    %p164 = por %p162, %p163
    %p165 = scmp.ne.s32.totalorder %s156, %s157
    %p166 = scmp.eq.s32.totalorder %s20, 0
    %p167 = por %p165, %p166
    %p168 = scmp.ne.s32.totalorder %s156, %s157
    %p169 = scmp.eq.s32.totalorder %s21, 1
    %p170 = por %p168, %p169
    %p172 = scmp.ne.s32.totalorder %s157, %s171
    %p173 = scmp.eq.s32.totalorder %s21, 0
    %p174 = por %p172, %p173
    %s176 = sadd.s32 %s175, 1
    %p179 = scmp.eq.s32.totalorder %s15, 1
    %p180 = scmp.ne.s32.totalorder %s175, %s177
    %p181 = scmp.eq.s32.totalorder %s15, 0
    %p182 = por %p180, %p181
    %p183 = scmp.ne.s32.totalorder %s175, %s177
    %p184 = scmp.eq.s32.totalorder %s20, 1
    %p185 = por %p183, %p184
    %p186 = scmp.ne.s32.totalorder %s177, %s178
    %p187 = scmp.eq.s32.totalorder %s20, 0
    %p188 = por %p186, %p187
    %p189 = scmp.ne.s32.totalorder %s177, %s178
    %p190 = scmp.eq.s32.totalorder %s21, 1
    %p191 = por %p189, %p190
    %p193 = scmp.ne.s32.totalorder %s178, %s192
    %p194 = scmp.eq.s32.totalorder %s21, 0
    %p195 = por %p193, %p194
    %s197 = sadd.s32 %s196, 1
    %p200 = scmp.eq.s32.totalorder %s15, 1
    %p201 = scmp.ne.s32.totalorder %s196, %s198
    %p202 = scmp.eq.s32.totalorder %s15, 0
    %p203 = por %p201, %p202
    %p204 = scmp.ne.s32.totalorder %s196, %s198
    %p205 = scmp.eq.s32.totalorder %s20, 1
    %p206 = por %p204, %p205
    %p207 = scmp.ne.s32.totalorder %s198, %s199
    %p208 = scmp.eq.s32.totalorder %s20, 0
    %p209 = por %p207, %p208
    %p210 = scmp.ne.s32.totalorder %s198, %s199
    %p211 = scmp.eq.s32.totalorder %s21, 1
    %p212 = por %p210, %p211
    %p214 = scmp.ne.s32.totalorder %s199, %s213
    %p215 = scmp.eq.s32.totalorder %s21, 0
    %p216 = por %p214, %p215
    %s217 = ssub.s32 %s15, %s22
    %p218 = scmp.eq.s32.totalorder %s217, 0
    %s220 = sadd.s32 %s219, 1
    %s221 = scalar_select %p218, %s219, %s220
    %p224 = pneg %p218
    %p225 = scmp.eq.s32.totalorder %s15, 1
    %p226 = por %p224, %p225
    %p227 = scmp.ne.s32.totalorder %s219, %s222
    %p228 = scmp.eq.s32.totalorder %s15, 0
    %p229 = por %p227, %p228
    %p230 = scmp.ne.s32.totalorder %s219, %s222
    %p231 = scmp.eq.s32.totalorder %s20, 1
    %p232 = por %p230, %p231
    %p233 = scmp.ne.s32.totalorder %s222, %s223
    %p234 = scmp.eq.s32.totalorder %s20, 0
    %p235 = por %p233, %p234
    %p236 = scmp.ne.s32.totalorder %s222, %s223
    %p237 = scmp.eq.s32.totalorder %s21, 1
    %p238 = por %p236, %p237
    %p240 = scmp.ne.s32.totalorder %s223, %s239
    %p241 = scmp.eq.s32.totalorder %s21, 0
    %p242 = por %p240, %p241
    %p243 = scmp.le.s32.totalorder 1, %s15
    %p244 = scmp.lt.s32.totalorder %s15, 3
    %p245 = pnand %p243, %p244
    %p246 = pneg %p245
    // Predicated region
    $region9: #{atari_a2c_forward.3} parent=5 // pred_check
      _
    $region10: #{atari_a2c_forward.3} parent=5 // pred_check_branch
      %248 = sbr.rel (%p245) target = $region12
    $region11: #{atari_a2c_forward.3} parent=5 // pred_region
      %s249 = ssub.s32 %s15, 1
      // Predicated region
      $region13: #{atari_a2c_forward.3} parent=11 // pred_check
        %p250 = pneg %p62
      $region14: #{atari_a2c_forward.3} parent=11 // pred_check_branch
        %252 = sbr.rel (%p250) target = $region16
      $region15: #{atari_a2c_forward.3} parent=11 // pred_region
        _
      $region16: #{atari_a2c_forward.3} parent=11 // pred_fallthru
        _
      // Predicated region
      $region17: #{atari_a2c_forward.3} parent=11 // pred_check
        %p253 = pneg %p83
      $region18: #{atari_a2c_forward.3} parent=11 // pred_check_branch
        %255 = sbr.rel (%p253) target = $region20
      $region19: #{atari_a2c_forward.3} parent=11 // pred_region
        _
      $region20: #{atari_a2c_forward.3} parent=11 // pred_fallthru
        _
      // Predicated region
      $region21: #{atari_a2c_forward.3} parent=11 // pred_check
        %p256 = pneg %p104
      $region22: #{atari_a2c_forward.3} parent=11 // pred_check_branch
        %258 = sbr.rel (%p256) target = $region24
      $region23: #{atari_a2c_forward.3} parent=11 // pred_region
        _
      $region24: #{atari_a2c_forward.3} parent=11 // pred_fallthru
        _
      // Predicated region
      $region25: #{atari_a2c_forward.3} parent=11 // pred_check
        %p259 = pneg %p125
      $region26: #{atari_a2c_forward.3} parent=11 // pred_check_branch
        %261 = sbr.rel (%p259) target = $region28
      $region27: #{atari_a2c_forward.3} parent=11 // pred_region
        _
      $region28: #{atari_a2c_forward.3} parent=11 // pred_fallthru
        _
      // Predicated region
      $region29: #{atari_a2c_forward.3} parent=11 // pred_check
        %p262 = pneg %p146
      $region30: #{atari_a2c_forward.3} parent=11 // pred_check_branch
        %264 = sbr.rel (%p262) target = $region32
      $region31: #{atari_a2c_forward.3} parent=11 // pred_region
        _
      $region32: #{atari_a2c_forward.3} parent=11 // pred_fallthru
        _
      // Predicated region
      $region33: #{atari_a2c_forward.3} parent=11 // pred_check
        %p265 = pneg %p167
      $region34: #{atari_a2c_forward.3} parent=11 // pred_check_branch
        %267 = sbr.rel (%p265) target = $region36
      $region35: #{atari_a2c_forward.3} parent=11 // pred_region
        _
      $region36: #{atari_a2c_forward.3} parent=11 // pred_fallthru
        _
      // Predicated region
      $region37: #{atari_a2c_forward.3} parent=11 // pred_check
        %p268 = pneg %p188
      $region38: #{atari_a2c_forward.3} parent=11 // pred_check_branch
        %270 = sbr.rel (%p268) target = $region40
      $region39: #{atari_a2c_forward.3} parent=11 // pred_region
        _
      $region40: #{atari_a2c_forward.3} parent=11 // pred_fallthru
        _
      // Predicated region
      $region41: #{atari_a2c_forward.3} parent=11 // pred_check
        %p271 = pneg %p209
      $region42: #{atari_a2c_forward.3} parent=11 // pred_check_branch
        %273 = sbr.rel (%p271) target = $region44
      $region43: #{atari_a2c_forward.3} parent=11 // pred_region
        _
      $region44: #{atari_a2c_forward.3} parent=11 // pred_fallthru
        _
    $region12: #{atari_a2c_forward.3} parent=5 // pred_fallthru
      _
    %p274 = scmp.lt.s32.totalorder %s15, 2
    // Predicated region
    $region45: #{atari_a2c_forward.3} parent=5 // pred_check
      %p275 = pneg %p274
    $region46: #{atari_a2c_forward.3} parent=5 // pred_check_branch
      %277 = sbr.rel (%p275) target = $region48
    $region47: #{atari_a2c_forward.3} parent=5 // pred_region
      // Predicated region
      $region49: #{atari_a2c_forward.3} parent=47 // pred_check
        %p278 = pneg %p35
      $region50: #{atari_a2c_forward.3} parent=47 // pred_check_branch
        %280 = sbr.rel (%p278) target = $region52
      $region51: #{atari_a2c_forward.3} parent=47 // pred_region
        %p281 = scmp.lt.s32.totalorder %s15, 1
        %s282 = scalar_select %p281, %s15, 1
        %s283 = smul.addr %s282, 4
        %s284 = smul.addr %s283, 2
        %s285 = scalar_lea.vmem %s0, %s284
      $region52: #{atari_a2c_forward.3} parent=47 // pred_fallthru
        _
    $region48: #{atari_a2c_forward.3} parent=5 // pred_fallthru
      _
    %p286 = scmp.le.s32.totalorder 1, %s15
    %p287 = scmp.lt.s32.totalorder %s15, 3
    %p288 = pnand %p286, %p287
    %p289 = pneg %p288
    // Predicated region
    $region53: #{atari_a2c_forward.3} parent=5 // pred_check
      _
    $region54: #{atari_a2c_forward.3} parent=5 // pred_check_branch
      %291 = sbr.rel (%p288) target = $region56
    $region55: #{atari_a2c_forward.3} parent=5 // pred_region
      %s292 = ssub.s32 %s15, 1
      %p293 = scmp.lt.s32.totalorder %s20, 1
      %s294 = scalar_select %p293, %s20, 1
      %s295 = smul.addr %s294, 4
      %s296 = smul.addr %s295, 2
      %s297 = scalar_lea.vmem %s0, %s296
      %p298 = pneg %p41
      %p299 = pneg %p38
      %p300 = pneg %p62
      %p301 = pneg %p59
      %p302 = pneg %p83
      %p303 = pneg %p80
      %p304 = pneg %p104
      %p305 = pneg %p101
      %p306 = pneg %p125
      %p307 = pneg %p122
      %p308 = pneg %p146
      %p309 = pneg %p143
      %p310 = pneg %p167
      %p311 = pneg %p164
      %p312 = pneg %p188
      %p313 = pneg %p185
      %p314 = pneg %p209
      %p315 = pneg %p206
      %p316 = pneg %p235
      %p317 = pneg %p232
      %p318 = scmp.lt.s32.totalorder %s20, 1
      %s319 = scalar_select %p318, %s20, 1
      %s320 = scalar_lea.vmem %s9, %s319
      %p321 = scmp.lt.s32.totalorder %s20, 1
      %s322 = scalar_select %p321, %s20, 1
      %s323 = smul.addr %s322, 4
      %s324 = smul.addr %s323, 2
      %s325 = scalar_lea.vmem %s0, %s324
      %p326 = scmp.lt.s32.totalorder %s20, 1
      %s327 = scalar_select %p326, %s20, 1
      %s328 = scalar_lea.vmem %s9, %s327
      %v330 = vld [vmem:[%s325] sm:$0x3]
      %v331 = vld [vmem:[%s325 + $0x2] sm:$0x3]
      %v332 = vld [vmem:[%s325 + $0x4] sm:$0x3]
      %v333 = vld [vmem:[%s325 + $0x6] sm:$0x3]
      %v334 = vld [vmem:[%s1] sm:$0xf]
      %v335 = vld [vmem:[%s1 + $0x4] sm:$0xf]
      %v336 = vld [vmem:[%s1 + $0x8] sm:$0xf]
      %v337 = vld [vmem:[%s1 + $0xc] sm:$0xf]
      %v338 = vld [vmem:[%s1 + $0x10] sm:$0xf]
      %v339 = vld [vmem:[%s1 + $0x14] sm:$0xf]
      %v340 = vld [vmem:[%s1 + $0x18] sm:$0xf]
      %v341 = vld [vmem:[%s1 + $0x1c] sm:$0xf]
      %v342 = vld [vmem:[%s1 + $0x20] sm:$0xf]
      %v343 = vld [vmem:[%s1 + $0x24] sm:$0xf]
      %v344 = vld [vmem:[%s1 + $0x28] sm:$0xf]
      %v345 = vld [vmem:[%s1 + $0x2c] sm:$0xf]
      %v346 = vld [vmem:[%s1 + $0x30] sm:$0xf]
      %v347 = vld [vmem:[%s1 + $0x34] sm:$0xf]
      %v348 = vld [vmem:[%s1 + $0x38] sm:$0xf]
      %v349 = vld [vmem:[%s1 + $0x3c] sm:$0xf]
      %s350 = scalar_lea.vmem %s1, 64
      %v351 = vld [vmem:[%s350] sm:$0xf]
      %v352 = vld [vmem:[%s350 + $0x4] sm:$0xf]
      %v353 = vld [vmem:[%s350 + $0x8] sm:$0xf]
      %v354 = vld [vmem:[%s350 + $0xc] sm:$0xf]
      %v355 = vld [vmem:[%s350 + $0x10] sm:$0xf]
      %v356 = vld [vmem:[%s350 + $0x14] sm:$0xf]
      %v357 = vld [vmem:[%s350 + $0x18] sm:$0xf]
      %v358 = vld [vmem:[%s350 + $0x1c] sm:$0xf]
      %v359 = vld [vmem:[%s350 + $0x20] sm:$0xf]
      %v360 = vld [vmem:[%s350 + $0x24] sm:$0xf]
      %v361 = vld [vmem:[%s350 + $0x28] sm:$0xf]
      %v362 = vld [vmem:[%s350 + $0x2c] sm:$0xf]
      %v363 = vld [vmem:[%s350 + $0x30] sm:$0xf]
      %v364 = vld [vmem:[%s350 + $0x34] sm:$0xf]
      %v365 = vld [vmem:[%s350 + $0x38] sm:$0xf]
      %v366 = vld [vmem:[%s350 + $0x3c] sm:$0xf]
      %s367 = scalar_lea.vmem %s1, 128
      %v368 = vld [vmem:[%s367] sm:$0xf]
      %v369 = vld [vmem:[%s367 + $0x4] sm:$0xf]
      %v370 = vld [vmem:[%s367 + $0x8] sm:$0xf]
      %v371 = vld [vmem:[%s367 + $0xc] sm:$0xf]
      %v372 = vld [vmem:[%s367 + $0x10] sm:$0xf]
      %v373 = vld [vmem:[%s367 + $0x14] sm:$0xf]
      %v374 = vld [vmem:[%s367 + $0x18] sm:$0xf]
      %v375 = vld [vmem:[%s367 + $0x1c] sm:$0xf]
      %v376 = vld [vmem:[%s367 + $0x20] sm:$0xf]
      %v377 = vld [vmem:[%s367 + $0x24] sm:$0xf]
      %v378 = vld [vmem:[%s367 + $0x28] sm:$0xf]
      %v379 = vld [vmem:[%s367 + $0x2c] sm:$0xf]
      %v380 = vld [vmem:[%s367 + $0x30] sm:$0xf]
      %v381 = vld [vmem:[%s367 + $0x34] sm:$0xf]
      %v382 = vld [vmem:[%s367 + $0x38] sm:$0xf]
      %v383 = vld [vmem:[%s367 + $0x3c] sm:$0xf]
      %s384 = scalar_lea.vmem %s1, 192
      %v385 = vld [vmem:[%s384] sm:$0xf]
      %v386 = vld [vmem:[%s384 + $0x4] sm:$0xf]
      %v387 = vld [vmem:[%s384 + $0x8] sm:$0xf]
      %v388 = vld [vmem:[%s384 + $0xc] sm:$0xf]
      %v389 = vld [vmem:[%s384 + $0x10] sm:$0xf]
      %v390 = vld [vmem:[%s384 + $0x14] sm:$0xf]
      %v391 = vld [vmem:[%s384 + $0x18] sm:$0xf]
      %v392 = vld [vmem:[%s384 + $0x1c] sm:$0xf]
      %v393 = vld [vmem:[%s384 + $0x20] sm:$0xf]
      %v394 = vld [vmem:[%s384 + $0x24] sm:$0xf]
      %v395 = vld [vmem:[%s384 + $0x28] sm:$0xf]
      %v396 = vld [vmem:[%s384 + $0x2c] sm:$0xf]
      %v397 = vld [vmem:[%s384 + $0x30] sm:$0xf]
      %v398 = vld [vmem:[%s384 + $0x34] sm:$0xf]
      %v399 = vld [vmem:[%s384 + $0x38] sm:$0xf]
      %v400 = vld [vmem:[%s384 + $0x3c] sm:$0xf]
      %v401 = vld [vmem:[%s2] sm:$0x1]
      %403 = vst [vmem:[#allocation1] ss:$4 sm:$0xff] %v330
      %v404 = vld.sshfl [vmem:[#allocation1] sm:$0xff pattern:$0x73625140]
      %v405 = vshrl.u32 %v404, 16
      %v407 = vshll.u32 %v404, 16
      %v409 = vrot.slane %v407, 1
      %v410 = vor.u32 %v405, %v409
      %v428 = vunpack.c.l.b16 %v351
      %v429 = vunpack.c.l.b16 %v352
      %v430 = vunpack.c.l.b16 %v353
      %v431 = vunpack.c.l.b16 %v354
      %v432 = vunpack.c.l.b16 %v355
      %v433 = vunpack.c.l.b16 %v356
      %v434 = vunpack.c.l.b16 %v357
      %v435 = vunpack.c.l.b16 %v358
      %v436 = vunpack.c.l.b16 %v359
      %v437 = vunpack.c.l.b16 %v360
      %v438 = vunpack.c.l.b16 %v361
      %v439 = vunpack.c.l.b16 %v362
      %v440 = vunpack.c.l.b16 %v363
      %v441 = vunpack.c.l.b16 %v364
      %v442 = vunpack.c.l.b16 %v365
      %v443 = vunpack.c.l.b16 %v366
      %v444 = vpack.c.b16 %v429, %v428
      %v445 = vpack.c.b16 %v431, %v430
      %v446 = vpack.c.b16 %v433, %v432
      %v447 = vpack.c.b16 %v435, %v434
      %v448 = vpack.c.b16 %v437, %v436
      %v449 = vpack.c.b16 %v439, %v438
      %v450 = vpack.c.b16 %v441, %v440
      %v451 = vpack.c.b16 %v443, %v442
      %460 = vmatpush.bf16.msra.mxu0 %v451
      %461 = vmatpush.bf16.msra.mxu0 %v450
      %462 = vmatpush.bf16.msra.mxu0 %v449
      %463 = vmatpush.bf16.msra.mxu0 %v448
      %464 = vmatpush.bf16.msra.mxu0 %v447
      %465 = vmatpush.bf16.msra.mxu0 %v446
      %466 = vmatpush.bf16.msra.mxu0 %v445
      %467 = vmatpush.bf16.msra.mxu0 %v444
      %468 = vmatmul.bf16.gmra.mxu0 %v410
      %v469 = vpop.f32.mrf.mxu0
      %v470 = vadd.f32 0.0, %v469
      %v471 = vpop.f32.mrf.mxu0
      %472 = vdwg.mxu0
      %v489 = vunpack.c.l.b16 %v334
      %v490 = vunpack.c.l.b16 %v335
      %v491 = vunpack.c.l.b16 %v336
      %v492 = vunpack.c.l.b16 %v337
      %v493 = vunpack.c.l.b16 %v338
      %v494 = vunpack.c.l.b16 %v339
      %v495 = vunpack.c.l.b16 %v340
      %v496 = vunpack.c.l.b16 %v341
      %v497 = vunpack.c.l.b16 %v342
      %v498 = vunpack.c.l.b16 %v343
      %v499 = vunpack.c.l.b16 %v344
      %v500 = vunpack.c.l.b16 %v345
      %v501 = vunpack.c.l.b16 %v346
      %v502 = vunpack.c.l.b16 %v347
      %v503 = vunpack.c.l.b16 %v348
      %v504 = vunpack.c.l.b16 %v349
      %v505 = vpack.c.b16 %v490, %v489
      %v506 = vpack.c.b16 %v492, %v491
      %v507 = vpack.c.b16 %v494, %v493
      %v508 = vpack.c.b16 %v496, %v495
      %v509 = vpack.c.b16 %v498, %v497
      %v510 = vpack.c.b16 %v500, %v499
      %v511 = vpack.c.b16 %v502, %v501
      %v512 = vpack.c.b16 %v504, %v503
      %521 = vmatpush.bf16.msra.mxu0 %v512
      %522 = vmatpush.bf16.msra.mxu0 %v511
      %523 = vmatpush.bf16.msra.mxu0 %v510
      %524 = vmatpush.bf16.msra.mxu0 %v509
      %525 = vmatpush.bf16.msra.mxu0 %v508
      %526 = vmatpush.bf16.msra.mxu0 %v507
      %527 = vmatpush.bf16.msra.mxu0 %v506
      %528 = vmatpush.bf16.msra.mxu0 %v505
      %529 = vmatmul.bf16.gmra.mxu0 %v330
      %v530 = vpop.f32.mrf.mxu0
      %v531 = vadd.f32 %v470, %v530
      %v532 = vpop.f32.mrf.mxu0
      %533 = vdwg.mxu0
      %v550 = vunpack.c.l.b16 %v368
      %v551 = vunpack.c.l.b16 %v369
      %v552 = vunpack.c.l.b16 %v370
      %v553 = vunpack.c.l.b16 %v371
      %v554 = vunpack.c.l.b16 %v372
      %v555 = vunpack.c.l.b16 %v373
      %v556 = vunpack.c.l.b16 %v374
      %v557 = vunpack.c.l.b16 %v375
      %v558 = vunpack.c.l.b16 %v376
      %v559 = vunpack.c.l.b16 %v377
      %v560 = vunpack.c.l.b16 %v378
      %v561 = vunpack.c.l.b16 %v379
      %v562 = vunpack.c.l.b16 %v380
      %v563 = vunpack.c.l.b16 %v381
      %v564 = vunpack.c.l.b16 %v382
      %v565 = vunpack.c.l.b16 %v383
      %v566 = vpack.c.b16 %v551, %v550
      %v567 = vpack.c.b16 %v553, %v552
      %v568 = vpack.c.b16 %v555, %v554
      %v569 = vpack.c.b16 %v557, %v556
      %v570 = vpack.c.b16 %v559, %v558
      %v571 = vpack.c.b16 %v561, %v560
      %v572 = vpack.c.b16 %v563, %v562
      %v573 = vpack.c.b16 %v565, %v564
      %582 = vmatpush.bf16.msra.mxu0 %v573
      %583 = vmatpush.bf16.msra.mxu0 %v572
      %584 = vmatpush.bf16.msra.mxu0 %v571
      %585 = vmatpush.bf16.msra.mxu0 %v570
      %586 = vmatpush.bf16.msra.mxu0 %v569
      %587 = vmatpush.bf16.msra.mxu0 %v568
      %588 = vmatpush.bf16.msra.mxu0 %v567
      %589 = vmatpush.bf16.msra.mxu0 %v566
      %590 = vmatmul.bf16.gmra.mxu0 %v331
      %v591 = vpop.f32.mrf.mxu0
      %v592 = vadd.f32 0.0, %v591
      %v593 = vpop.f32.mrf.mxu0
      %594 = vdwg.mxu0
      %v595 = vadd.f32 %v531, %v592
      %597 = vst [vmem:[#allocation1] ss:$4 sm:$0xff] %v331
      %v598 = vld.sshfl [vmem:[#allocation1] sm:$0xff pattern:$0x73625140]
      %v599 = vshrl.u32 %v598, 16
      %v601 = vshll.u32 %v598, 16
      %v603 = vrot.slane %v601, 1
      %v604 = vor.u32 %v599, %v603
      %v622 = vunpack.c.l.b16 %v385
      %v623 = vunpack.c.l.b16 %v386
      %v624 = vunpack.c.l.b16 %v387
      %v625 = vunpack.c.l.b16 %v388
      %v626 = vunpack.c.l.b16 %v389
      %v627 = vunpack.c.l.b16 %v390
      %v628 = vunpack.c.l.b16 %v391
      %v629 = vunpack.c.l.b16 %v392
      %v630 = vunpack.c.l.b16 %v393
      %v631 = vunpack.c.l.b16 %v394
      %v632 = vunpack.c.l.b16 %v395
      %v633 = vunpack.c.l.b16 %v396
      %v634 = vunpack.c.l.b16 %v397
      %v635 = vunpack.c.l.b16 %v398
      %v636 = vunpack.c.l.b16 %v399
      %v637 = vunpack.c.l.b16 %v400
      %v638 = vpack.c.b16 %v623, %v622
      %v639 = vpack.c.b16 %v625, %v624
      %v640 = vpack.c.b16 %v627, %v626
      %v641 = vpack.c.b16 %v629, %v628
      %v642 = vpack.c.b16 %v631, %v630
      %v643 = vpack.c.b16 %v633, %v632
      %v644 = vpack.c.b16 %v635, %v634
      %v645 = vpack.c.b16 %v637, %v636
      %654 = vmatpush.bf16.msra.mxu0 %v645
      %655 = vmatpush.bf16.msra.mxu0 %v644
      %656 = vmatpush.bf16.msra.mxu0 %v643
      %657 = vmatpush.bf16.msra.mxu0 %v642
      %658 = vmatpush.bf16.msra.mxu0 %v641
      %659 = vmatpush.bf16.msra.mxu0 %v640
      %660 = vmatpush.bf16.msra.mxu0 %v639
      %661 = vmatpush.bf16.msra.mxu0 %v638
      %662 = vmatmul.bf16.gmra.mxu0 %v604
      %v663 = vpop.f32.mrf.mxu0
      %v664 = vadd.f32 0.0, %v663
      %v665 = vpop.f32.mrf.mxu0
      %666 = vdwg.mxu0
      %v667 = vadd.f32 %v595, %v664
      %v669 = vperm.slane %v401, 0
      %v671 = vadd.f32 %v667, %v669
      %v672 = vmax.f32 %v671, 0.0
      %v673 = vpack.c.bf16 %v672, %v672
      %674 = vst [vmem:[#allocation1] ss:$4 sm:$0xff] %v331
      %v675 = vld.sshfl [vmem:[#allocation1] sm:$0xff pattern:$0x73625140]
      %v676 = vshrl.u32 %v675, 16
      %v678 = vshll.u32 %v675, 16
      %v680 = vrot.slane %v678, 1
      %v681 = vor.u32 %v676, %v680
      %683 = vmatpush.bf16.msra.mxu0 %v451
      %684 = vmatpush.bf16.msra.mxu0 %v450
      %685 = vmatpush.bf16.msra.mxu0 %v449
      %686 = vmatpush.bf16.msra.mxu0 %v448
      %687 = vmatpush.bf16.msra.mxu0 %v447
      %688 = vmatpush.bf16.msra.mxu0 %v446
      %689 = vmatpush.bf16.msra.mxu0 %v445
      %690 = vmatpush.bf16.msra.mxu0 %v444
      %691 = vmatmul.bf16.gmra.mxu0 %v681
      %v692 = vpop.f32.mrf.mxu0
      %v693 = vadd.f32 0.0, %v692
      %v694 = vpop.f32.mrf.mxu0
      %695 = vdwg.mxu0
      %696 = vmatpush.bf16.msra.mxu0 %v512
      %697 = vmatpush.bf16.msra.mxu0 %v511
      %698 = vmatpush.bf16.msra.mxu0 %v510
      %699 = vmatpush.bf16.msra.mxu0 %v509
      %700 = vmatpush.bf16.msra.mxu0 %v508
      %701 = vmatpush.bf16.msra.mxu0 %v507
      %702 = vmatpush.bf16.msra.mxu0 %v506
      %703 = vmatpush.bf16.msra.mxu0 %v505
      %704 = vmatmul.bf16.gmra.mxu0 %v331
      %v705 = vpop.f32.mrf.mxu0
      %v706 = vadd.f32 %v693, %v705
      %v707 = vpop.f32.mrf.mxu0
      %708 = vdwg.mxu0
      %709 = vmatpush.bf16.msra.mxu0 %v573
      %710 = vmatpush.bf16.msra.mxu0 %v572
      %711 = vmatpush.bf16.msra.mxu0 %v571
      %712 = vmatpush.bf16.msra.mxu0 %v570
      %713 = vmatpush.bf16.msra.mxu0 %v569
      %714 = vmatpush.bf16.msra.mxu0 %v568
      %715 = vmatpush.bf16.msra.mxu0 %v567
      %716 = vmatpush.bf16.msra.mxu0 %v566
      %717 = vmatmul.bf16.gmra.mxu0 %v332
      %v718 = vpop.f32.mrf.mxu0
      %v719 = vadd.f32 0.0, %v718
      %v720 = vpop.f32.mrf.mxu0
      %721 = vdwg.mxu0
      %v722 = vadd.f32 %v706, %v719
      %724 = vst [vmem:[#allocation1] ss:$4 sm:$0xff] %v332
      %v725 = vld.sshfl [vmem:[#allocation1] sm:$0xff pattern:$0x73625140]
      %v726 = vshrl.u32 %v725, 16
      %v728 = vshll.u32 %v725, 16
      %v730 = vrot.slane %v728, 1
      %v731 = vor.u32 %v726, %v730
      %733 = vmatpush.bf16.msra.mxu0 %v645
      %734 = vmatpush.bf16.msra.mxu0 %v644
      %735 = vmatpush.bf16.msra.mxu0 %v643
      %736 = vmatpush.bf16.msra.mxu0 %v642
      %737 = vmatpush.bf16.msra.mxu0 %v641
      %738 = vmatpush.bf16.msra.mxu0 %v640
      %739 = vmatpush.bf16.msra.mxu0 %v639
      %740 = vmatpush.bf16.msra.mxu0 %v638
      %741 = vmatmul.bf16.gmra.mxu0 %v731
      %v742 = vpop.f32.mrf.mxu0
      %v743 = vadd.f32 0.0, %v742
      %v744 = vpop.f32.mrf.mxu0
      %745 = vdwg.mxu0
      %v746 = vadd.f32 %v722, %v743
      %v747 = vadd.f32 %v746, %v669
      %v748 = vmax.f32 %v747, 0.0
      %v749 = vpack.c.bf16 %v748, %v748
      %750 = vst [vmem:[#allocation1] ss:$4 sm:$0xff] %v332
      %v751 = vld.sshfl [vmem:[#allocation1] sm:$0xff pattern:$0x73625140]
      %v752 = vshrl.u32 %v751, 16
      %v754 = vshll.u32 %v751, 16
      %v756 = vrot.slane %v754, 1
      %v757 = vor.u32 %v752, %v756
      %759 = vmatpush.bf16.msra.mxu0 %v451
      %760 = vmatpush.bf16.msra.mxu0 %v450
      %761 = vmatpush.bf16.msra.mxu0 %v449
      %762 = vmatpush.bf16.msra.mxu0 %v448
      %763 = vmatpush.bf16.msra.mxu0 %v447
      %764 = vmatpush.bf16.msra.mxu0 %v446
      %765 = vmatpush.bf16.msra.mxu0 %v445
      %766 = vmatpush.bf16.msra.mxu0 %v444
      %767 = vmatmul.bf16.gmra.mxu0 %v757
      %v768 = vpop.f32.mrf.mxu0
      %v769 = vadd.f32 0.0, %v768
      %v770 = vpop.f32.mrf.mxu0
      %771 = vdwg.mxu0
      %772 = vmatpush.bf16.msra.mxu0 %v512
      %773 = vmatpush.bf16.msra.mxu0 %v511
      %774 = vmatpush.bf16.msra.mxu0 %v510
      %775 = vmatpush.bf16.msra.mxu0 %v509
      %776 = vmatpush.bf16.msra.mxu0 %v508
      %777 = vmatpush.bf16.msra.mxu0 %v507
      %778 = vmatpush.bf16.msra.mxu0 %v506
      %779 = vmatpush.bf16.msra.mxu0 %v505
      %780 = vmatmul.bf16.gmra.mxu0 %v332
      %v781 = vpop.f32.mrf.mxu0
      %v782 = vadd.f32 %v769, %v781
      %v783 = vpop.f32.mrf.mxu0
      %784 = vdwg.mxu0
      %785 = vmatpush.bf16.msra.mxu0 %v573
      %786 = vmatpush.bf16.msra.mxu0 %v572
      %787 = vmatpush.bf16.msra.mxu0 %v571
      %788 = vmatpush.bf16.msra.mxu0 %v570
      %789 = vmatpush.bf16.msra.mxu0 %v569
      %790 = vmatpush.bf16.msra.mxu0 %v568
      %791 = vmatpush.bf16.msra.mxu0 %v567
      %792 = vmatpush.bf16.msra.mxu0 %v566
      %793 = vmatmul.bf16.gmra.mxu0 %v333
      %v794 = vpop.f32.mrf.mxu0
      %v795 = vadd.f32 0.0, %v794
      %v796 = vpop.f32.mrf.mxu0
      %797 = vdwg.mxu0
      %v798 = vadd.f32 %v782, %v795
      %800 = vst [vmem:[#allocation1] ss:$4 sm:$0xff] %v333
      %v801 = vld.sshfl [vmem:[#allocation1] sm:$0xff pattern:$0x73625140]
      %v802 = vshrl.u32 %v801, 16
      %v804 = vshll.u32 %v801, 16
      %v806 = vrot.slane %v804, 1
      %v807 = vor.u32 %v802, %v806
      %809 = vmatpush.bf16.msra.mxu0 %v645
      %810 = vmatpush.bf16.msra.mxu0 %v644
      %811 = vmatpush.bf16.msra.mxu0 %v643
      %812 = vmatpush.bf16.msra.mxu0 %v642
      %813 = vmatpush.bf16.msra.mxu0 %v641
      %814 = vmatpush.bf16.msra.mxu0 %v640
      %815 = vmatpush.bf16.msra.mxu0 %v639
      %816 = vmatpush.bf16.msra.mxu0 %v638
      %817 = vmatmul.bf16.gmra.mxu0 %v807
      %v818 = vpop.f32.mrf.mxu0
      %v819 = vadd.f32 0.0, %v818
      %v820 = vpop.f32.mrf.mxu0
      %821 = vdwg.mxu0
      %v822 = vadd.f32 %v798, %v819
      %v823 = vadd.f32 %v822, %v669
      %v824 = vmax.f32 %v823, 0.0
      %v825 = vpack.c.bf16 %v824, %v824
      %v826 = vld [vmem:[%s3] sm:$0xf]
      %v827 = vld [vmem:[%s3 + $0x4] sm:$0xf]
      %v828 = vld [vmem:[%s3 + $0x8] sm:$0xf]
      %v829 = vld [vmem:[%s3 + $0xc] sm:$0xf]
      %v830 = vld [vmem:[%s3 + $0x10] sm:$0xf]
      %v831 = vld [vmem:[%s3 + $0x14] sm:$0xf]
      %v832 = vld [vmem:[%s3 + $0x18] sm:$0xf]
      %v833 = vld [vmem:[%s3 + $0x1c] sm:$0xf]
      %s834 = scalar_lea.vmem %s3, 32
      %v835 = vld [vmem:[%s834] sm:$0xf]
      %v836 = vld [vmem:[%s834 + $0x4] sm:$0xf]
      %v837 = vld [vmem:[%s834 + $0x8] sm:$0xf]
      %v838 = vld [vmem:[%s834 + $0xc] sm:$0xf]
      %v839 = vld [vmem:[%s834 + $0x10] sm:$0xf]
      %v840 = vld [vmem:[%s834 + $0x14] sm:$0xf]
      %v841 = vld [vmem:[%s834 + $0x18] sm:$0xf]
      %v842 = vld [vmem:[%s834 + $0x1c] sm:$0xf]
      %s843 = scalar_lea.vmem %s3, 64
      %v844 = vld [vmem:[%s843] sm:$0xf]
      %v845 = vld [vmem:[%s843 + $0x4] sm:$0xf]
      %v846 = vld [vmem:[%s843 + $0x8] sm:$0xf]
      %v847 = vld [vmem:[%s843 + $0xc] sm:$0xf]
      %v848 = vld [vmem:[%s843 + $0x10] sm:$0xf]
      %v849 = vld [vmem:[%s843 + $0x14] sm:$0xf]
      %v850 = vld [vmem:[%s843 + $0x18] sm:$0xf]
      %v851 = vld [vmem:[%s843 + $0x1c] sm:$0xf]
      %s852 = scalar_lea.vmem %s3, 96
      %v853 = vld [vmem:[%s852] sm:$0xf]
      %v854 = vld [vmem:[%s852 + $0x4] sm:$0xf]
      %v855 = vld [vmem:[%s852 + $0x8] sm:$0xf]
      %v856 = vld [vmem:[%s852 + $0xc] sm:$0xf]
      %v857 = vld [vmem:[%s852 + $0x10] sm:$0xf]
      %v858 = vld [vmem:[%s852 + $0x14] sm:$0xf]
      %v859 = vld [vmem:[%s852 + $0x18] sm:$0xf]
      %v860 = vld [vmem:[%s852 + $0x1c] sm:$0xf]
      %s861 = scalar_lea.vmem %s3, 128
      %v862 = vld [vmem:[%s861] sm:$0xf]
      %v863 = vld [vmem:[%s861 + $0x4] sm:$0xf]
      %v864 = vld [vmem:[%s861 + $0x8] sm:$0xf]
      %v865 = vld [vmem:[%s861 + $0xc] sm:$0xf]
      %v866 = vld [vmem:[%s861 + $0x10] sm:$0xf]
      %v867 = vld [vmem:[%s861 + $0x14] sm:$0xf]
      %v868 = vld [vmem:[%s861 + $0x18] sm:$0xf]
      %v869 = vld [vmem:[%s861 + $0x1c] sm:$0xf]
      %s870 = scalar_lea.vmem %s3, 160
      %v871 = vld [vmem:[%s870] sm:$0xf]
      %v872 = vld [vmem:[%s870 + $0x4] sm:$0xf]
      %v873 = vld [vmem:[%s870 + $0x8] sm:$0xf]
      %v874 = vld [vmem:[%s870 + $0xc] sm:$0xf]
      %v875 = vld [vmem:[%s870 + $0x10] sm:$0xf]
      %v876 = vld [vmem:[%s870 + $0x14] sm:$0xf]
      %v877 = vld [vmem:[%s870 + $0x18] sm:$0xf]
      %v878 = vld [vmem:[%s870 + $0x1c] sm:$0xf]
      %s879 = scalar_lea.vmem %s3, 192
      %v880 = vld [vmem:[%s879] sm:$0xf]
      %v881 = vld [vmem:[%s879 + $0x4] sm:$0xf]
      %v882 = vld [vmem:[%s879 + $0x8] sm:$0xf]
      %v883 = vld [vmem:[%s879 + $0xc] sm:$0xf]
      %v884 = vld [vmem:[%s879 + $0x10] sm:$0xf]
      %v885 = vld [vmem:[%s879 + $0x14] sm:$0xf]
      %v886 = vld [vmem:[%s879 + $0x18] sm:$0xf]
      %v887 = vld [vmem:[%s879 + $0x1c] sm:$0xf]
      %s888 = scalar_lea.vmem %s3, 224
      %v889 = vld [vmem:[%s888] sm:$0xf]
      %v890 = vld [vmem:[%s888 + $0x4] sm:$0xf]
      %v891 = vld [vmem:[%s888 + $0x8] sm:$0xf]
      %v892 = vld [vmem:[%s888 + $0xc] sm:$0xf]
      %v893 = vld [vmem:[%s888 + $0x10] sm:$0xf]
      %v894 = vld [vmem:[%s888 + $0x14] sm:$0xf]
      %v895 = vld [vmem:[%s888 + $0x18] sm:$0xf]
      %v896 = vld [vmem:[%s888 + $0x1c] sm:$0xf]
      %s897 = scalar_lea.vmem %s3, 256
      %v898 = vld [vmem:[%s897] sm:$0xf]
      %v899 = vld [vmem:[%s897 + $0x4] sm:$0xf]
      %v900 = vld [vmem:[%s897 + $0x8] sm:$0xf]
      %v901 = vld [vmem:[%s897 + $0xc] sm:$0xf]
      %v902 = vld [vmem:[%s897 + $0x10] sm:$0xf]
      %v903 = vld [vmem:[%s897 + $0x14] sm:$0xf]
      %v904 = vld [vmem:[%s897 + $0x18] sm:$0xf]
      %v905 = vld [vmem:[%s897 + $0x1c] sm:$0xf]
      %v906 = vld [vmem:[%s4] sm:$0x1]
      %v908 = vunpack.c.l.b16 %v673
      %v909 = vpack.c.b16 %v908, %v908
      %v911 = vshrl.u32 %v909, 16
      %v921 = vunpack.c.l.b16 %v835
      %v922 = vunpack.c.l.b16 %v836
      %v923 = vunpack.c.l.b16 %v837
      %v924 = vunpack.c.l.b16 %v838
      %v925 = vunpack.c.l.b16 %v839
      %v926 = vunpack.c.l.b16 %v840
      %v927 = vunpack.c.l.b16 %v841
      %v928 = vunpack.c.l.b16 %v842
      %v929 = vpack.c.b16 %v922, %v921
      %v930 = vpack.c.b16 %v924, %v923
      %v931 = vpack.c.b16 %v926, %v925
      %v932 = vpack.c.b16 %v928, %v927
      %vm937 = vcmask 523264
      %v939 = vsel %vm937, %v911, 0
      %941 = vmatpush.bf16.msra.mxu0 0
      %942 = vmatpush.bf16.msra.mxu0 0
      %943 = vmatpush.bf16.msra.mxu0 0
      %944 = vmatpush.bf16.msra.mxu0 0
      %945 = vmatpush.bf16.msra.mxu0 %v932
      %946 = vmatpush.bf16.msra.mxu0 %v931
      %947 = vmatpush.bf16.msra.mxu0 %v930
      %948 = vmatpush.bf16.msra.mxu0 %v929
      %949 = vmatmul.bf16.gmra.mxu0 %v939
      %v950 = vpop.f32.mrf.mxu0
      %v951 = vadd.f32 0.0, %v950
      %v952 = vpop.f32.mrf.mxu0
      %953 = vdwg.mxu0
      %v962 = vunpack.c.l.b16 %v826
      %v963 = vunpack.c.l.b16 %v827
      %v964 = vunpack.c.l.b16 %v828
      %v965 = vunpack.c.l.b16 %v829
      %v966 = vunpack.c.l.b16 %v830
      %v967 = vunpack.c.l.b16 %v831
      %v968 = vunpack.c.l.b16 %v832
      %v969 = vunpack.c.l.b16 %v833
      %v970 = vpack.c.b16 %v963, %v962
      %v971 = vpack.c.b16 %v965, %v964
      %v972 = vpack.c.b16 %v967, %v966
      %v973 = vpack.c.b16 %v969, %v968
      %v979 = vsel %vm937, %v673, 0
      %981 = vmatpush.bf16.msra.mxu0 0
      %982 = vmatpush.bf16.msra.mxu0 0
      %983 = vmatpush.bf16.msra.mxu0 0
      %984 = vmatpush.bf16.msra.mxu0 0
      %985 = vmatpush.bf16.msra.mxu0 %v973
      %986 = vmatpush.bf16.msra.mxu0 %v972
      %987 = vmatpush.bf16.msra.mxu0 %v971
      %988 = vmatpush.bf16.msra.mxu0 %v970
      %989 = vmatmul.bf16.gmra.mxu0 %v979
      %v990 = vpop.f32.mrf.mxu0
      %v991 = vadd.f32 %v951, %v990
      %v992 = vpop.f32.mrf.mxu0
      %993 = vdwg.mxu0
      %v994 = vrot.slane %v909, 1
      %v1003 = vunpack.c.l.b16 %v844
      %v1004 = vunpack.c.l.b16 %v845
      %v1005 = vunpack.c.l.b16 %v846
      %v1006 = vunpack.c.l.b16 %v847
      %v1007 = vunpack.c.l.b16 %v848
      %v1008 = vunpack.c.l.b16 %v849
      %v1009 = vunpack.c.l.b16 %v850
      %v1010 = vunpack.c.l.b16 %v851
      %v1011 = vpack.c.b16 %v1004, %v1003
      %v1012 = vpack.c.b16 %v1006, %v1005
      %v1013 = vpack.c.b16 %v1008, %v1007
      %v1014 = vpack.c.b16 %v1010, %v1009
      %v1020 = vsel %vm937, %v994, 0
      %1022 = vmatpush.bf16.msra.mxu0 0
      %1023 = vmatpush.bf16.msra.mxu0 0
      %1024 = vmatpush.bf16.msra.mxu0 0
      %1025 = vmatpush.bf16.msra.mxu0 0
      %1026 = vmatpush.bf16.msra.mxu0 %v1014
      %1027 = vmatpush.bf16.msra.mxu0 %v1013
      %1028 = vmatpush.bf16.msra.mxu0 %v1012
      %1029 = vmatpush.bf16.msra.mxu0 %v1011
      %1030 = vmatmul.bf16.gmra.mxu0 %v1020
      %v1031 = vpop.f32.mrf.mxu0
      %v1032 = vadd.f32 0.0, %v1031
      %v1033 = vpop.f32.mrf.mxu0
      %1034 = vdwg.mxu0
      %v1035 = vadd.f32 %v991, %v1032
      %v1044 = vunpack.c.l.b16 %v853
      %v1045 = vunpack.c.l.b16 %v854
      %v1046 = vunpack.c.l.b16 %v855
      %v1047 = vunpack.c.l.b16 %v856
      %v1048 = vunpack.c.l.b16 %v857
      %v1049 = vunpack.c.l.b16 %v858
      %v1050 = vunpack.c.l.b16 %v859
      %v1051 = vunpack.c.l.b16 %v860
      %v1052 = vpack.c.b16 %v1045, %v1044
      %v1053 = vpack.c.b16 %v1047, %v1046
      %v1054 = vpack.c.b16 %v1049, %v1048
      %v1055 = vpack.c.b16 %v1051, %v1050
      %v1061 = vsel %vm937, %v749, 0
      %1063 = vmatpush.bf16.msra.mxu0 0
      %1064 = vmatpush.bf16.msra.mxu0 0
      %1065 = vmatpush.bf16.msra.mxu0 0
      %1066 = vmatpush.bf16.msra.mxu0 0
      %1067 = vmatpush.bf16.msra.mxu0 %v1055
      %1068 = vmatpush.bf16.msra.mxu0 %v1054
      %1069 = vmatpush.bf16.msra.mxu0 %v1053
      %1070 = vmatpush.bf16.msra.mxu0 %v1052
      %1071 = vmatmul.bf16.gmra.mxu0 %v1061
      %v1072 = vpop.f32.mrf.mxu0
      %v1073 = vadd.f32 0.0, %v1072
      %v1074 = vpop.f32.mrf.mxu0
      %1075 = vdwg.mxu0
      %v1076 = vadd.f32 %v1035, %v1073
      %v1078 = vunpack.c.l.b16 %v749
      %v1079 = vpack.c.b16 %v1078, %v1078
      %v1081 = vshrl.u32 %v1079, 16
      %v1091 = vunpack.c.l.b16 %v862
      %v1092 = vunpack.c.l.b16 %v863
      %v1093 = vunpack.c.l.b16 %v864
      %v1094 = vunpack.c.l.b16 %v865
      %v1095 = vunpack.c.l.b16 %v866
      %v1096 = vunpack.c.l.b16 %v867
      %v1097 = vunpack.c.l.b16 %v868
      %v1098 = vunpack.c.l.b16 %v869
      %v1099 = vpack.c.b16 %v1092, %v1091
      %v1100 = vpack.c.b16 %v1094, %v1093
      %v1101 = vpack.c.b16 %v1096, %v1095
      %v1102 = vpack.c.b16 %v1098, %v1097
      %v1108 = vsel %vm937, %v1081, 0
      %1110 = vmatpush.bf16.msra.mxu0 0
      %1111 = vmatpush.bf16.msra.mxu0 0
      %1112 = vmatpush.bf16.msra.mxu0 0
      %1113 = vmatpush.bf16.msra.mxu0 0
      %1114 = vmatpush.bf16.msra.mxu0 %v1102
      %1115 = vmatpush.bf16.msra.mxu0 %v1101
      %1116 = vmatpush.bf16.msra.mxu0 %v1100
      %1117 = vmatpush.bf16.msra.mxu0 %v1099
      %1118 = vmatmul.bf16.gmra.mxu0 %v1108
      %v1119 = vpop.f32.mrf.mxu0
      %v1120 = vadd.f32 0.0, %v1119
      %v1121 = vpop.f32.mrf.mxu0
      %1122 = vdwg.mxu0
      %v1123 = vadd.f32 %v1076, %v1120
      %v1124 = vrot.slane %v1079, 1
      %v1133 = vunpack.c.l.b16 %v871
      %v1134 = vunpack.c.l.b16 %v872
      %v1135 = vunpack.c.l.b16 %v873
      %v1136 = vunpack.c.l.b16 %v874
      %v1137 = vunpack.c.l.b16 %v875
      %v1138 = vunpack.c.l.b16 %v876
      %v1139 = vunpack.c.l.b16 %v877
      %v1140 = vunpack.c.l.b16 %v878
      %v1141 = vpack.c.b16 %v1134, %v1133
      %v1142 = vpack.c.b16 %v1136, %v1135
      %v1143 = vpack.c.b16 %v1138, %v1137
      %v1144 = vpack.c.b16 %v1140, %v1139
      %v1150 = vsel %vm937, %v1124, 0
      %1152 = vmatpush.bf16.msra.mxu0 0
      %1153 = vmatpush.bf16.msra.mxu0 0
      %1154 = vmatpush.bf16.msra.mxu0 0
      %1155 = vmatpush.bf16.msra.mxu0 0
      %1156 = vmatpush.bf16.msra.mxu0 %v1144
      %1157 = vmatpush.bf16.msra.mxu0 %v1143
      %1158 = vmatpush.bf16.msra.mxu0 %v1142
      %1159 = vmatpush.bf16.msra.mxu0 %v1141
      %1160 = vmatmul.bf16.gmra.mxu0 %v1150
      %v1161 = vpop.f32.mrf.mxu0
      %v1162 = vadd.f32 0.0, %v1161
      %v1163 = vpop.f32.mrf.mxu0
      %1164 = vdwg.mxu0
      %v1165 = vadd.f32 %v1123, %v1162
      %v1174 = vunpack.c.l.b16 %v880
      %v1175 = vunpack.c.l.b16 %v881
      %v1176 = vunpack.c.l.b16 %v882
      %v1177 = vunpack.c.l.b16 %v883
      %v1178 = vunpack.c.l.b16 %v884
      %v1179 = vunpack.c.l.b16 %v885
      %v1180 = vunpack.c.l.b16 %v886
      %v1181 = vunpack.c.l.b16 %v887
      %v1182 = vpack.c.b16 %v1175, %v1174
      %v1183 = vpack.c.b16 %v1177, %v1176
      %v1184 = vpack.c.b16 %v1179, %v1178
      %v1185 = vpack.c.b16 %v1181, %v1180
      %v1191 = vsel %vm937, %v825, 0
      %1193 = vmatpush.bf16.msra.mxu0 0
      %1194 = vmatpush.bf16.msra.mxu0 0
      %1195 = vmatpush.bf16.msra.mxu0 0
      %1196 = vmatpush.bf16.msra.mxu0 0
      %1197 = vmatpush.bf16.msra.mxu0 %v1185
      %1198 = vmatpush.bf16.msra.mxu0 %v1184
      %1199 = vmatpush.bf16.msra.mxu0 %v1183
      %1200 = vmatpush.bf16.msra.mxu0 %v1182
      %1201 = vmatmul.bf16.gmra.mxu0 %v1191
      %v1202 = vpop.f32.mrf.mxu0
      %v1203 = vadd.f32 0.0, %v1202
      %v1204 = vpop.f32.mrf.mxu0
      %1205 = vdwg.mxu0
      %v1206 = vadd.f32 %v1165, %v1203
      %v1208 = vunpack.c.l.b16 %v825
      %v1209 = vpack.c.b16 %v1208, %v1208
      %v1211 = vshrl.u32 %v1209, 16
      %v1221 = vunpack.c.l.b16 %v889
      %v1222 = vunpack.c.l.b16 %v890
      %v1223 = vunpack.c.l.b16 %v891
      %v1224 = vunpack.c.l.b16 %v892
      %v1225 = vunpack.c.l.b16 %v893
      %v1226 = vunpack.c.l.b16 %v894
      %v1227 = vunpack.c.l.b16 %v895
      %v1228 = vunpack.c.l.b16 %v896
      %v1229 = vpack.c.b16 %v1222, %v1221
      %v1230 = vpack.c.b16 %v1224, %v1223
      %v1231 = vpack.c.b16 %v1226, %v1225
      %v1232 = vpack.c.b16 %v1228, %v1227
      %v1238 = vsel %vm937, %v1211, 0
      %1240 = vmatpush.bf16.msra.mxu0 0
      %1241 = vmatpush.bf16.msra.mxu0 0
      %1242 = vmatpush.bf16.msra.mxu0 0
      %1243 = vmatpush.bf16.msra.mxu0 0
      %1244 = vmatpush.bf16.msra.mxu0 %v1232
      %1245 = vmatpush.bf16.msra.mxu0 %v1231
      %1246 = vmatpush.bf16.msra.mxu0 %v1230
      %1247 = vmatpush.bf16.msra.mxu0 %v1229
      %1248 = vmatmul.bf16.gmra.mxu0 %v1238
      %v1249 = vpop.f32.mrf.mxu0
      %v1250 = vadd.f32 0.0, %v1249
      %v1251 = vpop.f32.mrf.mxu0
      %1252 = vdwg.mxu0
      %v1253 = vadd.f32 %v1206, %v1250
      %v1254 = vrot.slane %v1209, 1
      %v1263 = vunpack.c.l.b16 %v898
      %v1264 = vunpack.c.l.b16 %v899
      %v1265 = vunpack.c.l.b16 %v900
      %v1266 = vunpack.c.l.b16 %v901
      %v1267 = vunpack.c.l.b16 %v902
      %v1268 = vunpack.c.l.b16 %v903
      %v1269 = vunpack.c.l.b16 %v904
      %v1270 = vunpack.c.l.b16 %v905
      %v1271 = vpack.c.b16 %v1264, %v1263
      %v1272 = vpack.c.b16 %v1266, %v1265
      %v1273 = vpack.c.b16 %v1268, %v1267
      %v1274 = vpack.c.b16 %v1270, %v1269
      %v1280 = vsel %vm937, %v1254, 0
      %1282 = vmatpush.bf16.msra.mxu0 0
      %1283 = vmatpush.bf16.msra.mxu0 0
      %1284 = vmatpush.bf16.msra.mxu0 0
      %1285 = vmatpush.bf16.msra.mxu0 0
      %1286 = vmatpush.bf16.msra.mxu0 %v1274
      %1287 = vmatpush.bf16.msra.mxu0 %v1273
      %1288 = vmatpush.bf16.msra.mxu0 %v1272
      %1289 = vmatpush.bf16.msra.mxu0 %v1271
      %1290 = vmatmul.bf16.gmra.mxu0 %v1280
      %v1291 = vpop.f32.mrf.mxu0
      %v1292 = vadd.f32 0.0, %v1291
      %v1293 = vpop.f32.mrf.mxu0
      %1294 = vdwg.mxu0
      %v1295 = vadd.f32 %v1253, %v1292
      %v1296 = vadd.f32 %v1295, %v906
      %v1297 = vmax.f32 %v1296, 0.0
      %v1298 = vpack.c.bf16 %v1297, %v1297
      %v1299 = vld [vmem:[%s5] sm:$0xff]
      %v1300 = vld [vmem:[%s5 + $0x8] sm:$0xff]
      %v1301 = vld [vmem:[%s5 + $0x10] sm:$0xff]
      %v1302 = vld [vmem:[%s5 + $0x18] sm:$0xff]
      %v1303 = vld [vmem:[%s5 + $0x20] sm:$0xff]
      %v1304 = vld [vmem:[%s5 + $0x28] sm:$0xff]
      %v1305 = vld [vmem:[%s5 + $0x30] sm:$0xff]
      %v1306 = vld [vmem:[%s5 + $0x38] sm:$0xff]
      %v1307 = vld [vmem:[%s5 + $0x40] sm:$0xff]
      %v1308 = vld [vmem:[%s5 + $0x48] sm:$0xff]
      %v1309 = vld [vmem:[%s5 + $0x50] sm:$0xff]
      %v1310 = vld [vmem:[%s5 + $0x58] sm:$0xff]
      %v1311 = vld [vmem:[%s5 + $0x60] sm:$0xff]
      %v1312 = vld [vmem:[%s5 + $0x68] sm:$0xff]
      %v1313 = vld [vmem:[%s5 + $0x70] sm:$0xff]
      %v1314 = vld [vmem:[%s5 + $0x78] sm:$0xff]
      %v1315 = vld [vmem:[%s5 + $0x80] sm:$0xff]
      %v1316 = vld [vmem:[%s5 + $0x88] sm:$0xff]
      %v1317 = vld [vmem:[%s5 + $0x90] sm:$0xff]
      %v1318 = vld [vmem:[%s5 + $0x98] sm:$0xff]
      %v1319 = vld [vmem:[%s5 + $0xa0] sm:$0xff]
      %v1320 = vld [vmem:[%s5 + $0xa8] sm:$0xff]
      %v1321 = vld [vmem:[%s5 + $0xb0] sm:$0xff]
      %v1322 = vld [vmem:[%s5 + $0xb8] sm:$0xff]
      %v1323 = vld [vmem:[%s5 + $0xc0] sm:$0xff]
      %v1324 = vld [vmem:[%s5 + $0xc8] sm:$0xff]
      %v1325 = vld [vmem:[%s5 + $0xd0] sm:$0xff]
      %v1326 = vld [vmem:[%s5 + $0xd8] sm:$0xff]
      %v1327 = vld [vmem:[%s5 + $0xe0] sm:$0xff]
      %v1328 = vld [vmem:[%s5 + $0xe8] sm:$0xff]
      %v1329 = vld [vmem:[%s5 + $0xf0] sm:$0xff]
      %v1330 = vld [vmem:[%s5 + $0xf8] sm:$0xff]
      %v1331 = vld [vmem:[%s6] sm:$0xff]
      %v1364 = vunpack.c.l.b16 %v1299
      %v1365 = vunpack.c.h.b16 %v1299
      %v1366 = vunpack.c.l.b16 %v1300
      %v1367 = vunpack.c.h.b16 %v1300
      %v1368 = vunpack.c.l.b16 %v1301
      %v1369 = vunpack.c.h.b16 %v1301
      %v1370 = vunpack.c.l.b16 %v1302
      %v1371 = vunpack.c.h.b16 %v1302
      %v1372 = vunpack.c.l.b16 %v1303
      %v1373 = vunpack.c.h.b16 %v1303
      %v1374 = vunpack.c.l.b16 %v1304
      %v1375 = vunpack.c.h.b16 %v1304
      %v1376 = vunpack.c.l.b16 %v1305
      %v1377 = vunpack.c.h.b16 %v1305
      %v1378 = vunpack.c.l.b16 %v1306
      %v1379 = vunpack.c.h.b16 %v1306
      %v1380 = vunpack.c.l.b16 %v1307
      %v1381 = vunpack.c.h.b16 %v1307
      %v1382 = vunpack.c.l.b16 %v1308
      %v1383 = vunpack.c.h.b16 %v1308
      %v1384 = vunpack.c.l.b16 %v1309
      %v1385 = vunpack.c.h.b16 %v1309
      %v1386 = vunpack.c.l.b16 %v1310
      %v1387 = vunpack.c.h.b16 %v1310
      %v1388 = vunpack.c.l.b16 %v1311
      %v1389 = vunpack.c.h.b16 %v1311
      %v1390 = vunpack.c.l.b16 %v1312
      %v1391 = vunpack.c.h.b16 %v1312
      %v1392 = vunpack.c.l.b16 %v1313
      %v1393 = vunpack.c.h.b16 %v1313
      %v1394 = vunpack.c.l.b16 %v1314
      %v1395 = vunpack.c.h.b16 %v1314
      %v1396 = vunpack.c.l.b16 %v1315
      %v1397 = vunpack.c.h.b16 %v1315
      %v1398 = vunpack.c.l.b16 %v1316
      %v1399 = vunpack.c.h.b16 %v1316
      %v1400 = vunpack.c.l.b16 %v1317
      %v1401 = vunpack.c.h.b16 %v1317
      %v1402 = vunpack.c.l.b16 %v1318
      %v1403 = vunpack.c.h.b16 %v1318
      %v1404 = vunpack.c.l.b16 %v1319
      %v1405 = vunpack.c.h.b16 %v1319
      %v1406 = vunpack.c.l.b16 %v1320
      %v1407 = vunpack.c.h.b16 %v1320
      %v1408 = vunpack.c.l.b16 %v1321
      %v1409 = vunpack.c.h.b16 %v1321
      %v1410 = vunpack.c.l.b16 %v1322
      %v1411 = vunpack.c.h.b16 %v1322
      %v1412 = vunpack.c.l.b16 %v1323
      %v1413 = vunpack.c.h.b16 %v1323
      %v1414 = vunpack.c.l.b16 %v1324
      %v1415 = vunpack.c.h.b16 %v1324
      %v1416 = vunpack.c.l.b16 %v1325
      %v1417 = vunpack.c.h.b16 %v1325
      %v1418 = vunpack.c.l.b16 %v1326
      %v1419 = vunpack.c.h.b16 %v1326
      %v1420 = vunpack.c.l.b16 %v1327
      %v1421 = vunpack.c.h.b16 %v1327
      %v1422 = vunpack.c.l.b16 %v1328
      %v1423 = vunpack.c.h.b16 %v1328
      %v1424 = vunpack.c.l.b16 %v1329
      %v1425 = vunpack.c.h.b16 %v1329
      %v1426 = vunpack.c.l.b16 %v1330
      %v1427 = vunpack.c.h.b16 %v1330
      %v1428 = vpack.c.b16 %v1372, %v1364
      %v1429 = vpack.c.b16 %v1373, %v1365
      %v1430 = vpack.c.b16 %v1374, %v1366
      %v1431 = vpack.c.b16 %v1375, %v1367
      %v1432 = vpack.c.b16 %v1376, %v1368
      %v1433 = vpack.c.b16 %v1377, %v1369
      %v1434 = vpack.c.b16 %v1378, %v1370
      %v1435 = vpack.c.b16 %v1379, %v1371
      %v1436 = vpack.c.b16 %v1388, %v1380
      %v1437 = vpack.c.b16 %v1389, %v1381
      %v1438 = vpack.c.b16 %v1390, %v1382
      %v1439 = vpack.c.b16 %v1391, %v1383
      %v1440 = vpack.c.b16 %v1392, %v1384
      %v1441 = vpack.c.b16 %v1393, %v1385
      %v1442 = vpack.c.b16 %v1394, %v1386
      %v1443 = vpack.c.b16 %v1395, %v1387
      %v1444 = vpack.c.b16 %v1404, %v1396
      %v1445 = vpack.c.b16 %v1405, %v1397
      %v1446 = vpack.c.b16 %v1406, %v1398
      %v1447 = vpack.c.b16 %v1407, %v1399
      %v1448 = vpack.c.b16 %v1408, %v1400
      %v1449 = vpack.c.b16 %v1409, %v1401
      %v1450 = vpack.c.b16 %v1410, %v1402
      %v1451 = vpack.c.b16 %v1411, %v1403
      %v1452 = vpack.c.b16 %v1420, %v1412
      %v1453 = vpack.c.b16 %v1421, %v1413
      %v1454 = vpack.c.b16 %v1422, %v1414
      %v1455 = vpack.c.b16 %v1423, %v1415
      %v1456 = vpack.c.b16 %v1424, %v1416
      %v1457 = vpack.c.b16 %v1425, %v1417
      %v1458 = vpack.c.b16 %v1426, %v1418
      %v1459 = vpack.c.b16 %v1427, %v1419
      %v1493 = vperm.slane %v1331, 0
      %v1494 = vperm.slane %v1331, 1
      %v1495 = vperm.slane %v1331, 2
      %v1496 = vperm.slane %v1331, 3
      %v1497 = vperm.slane %v1331, 4
      %v1498 = vperm.slane %v1331, 5
      %v1499 = vperm.slane %v1331, 6
      %v1500 = vperm.slane %v1331, 7
      %v1510 = vsel %vm937, %v1298, 0
      %1512 = vmatpush.bf16.msra.mxu0 0
      %1513 = vmatpush.bf16.msra.mxu0 0
      %1514 = vmatpush.bf16.msra.mxu0 0
      %1515 = vmatpush.bf16.msra.mxu0 0
      %1516 = vmatpush.bf16.msra.mxu0 %v1452
      %1517 = vmatpush.bf16.msra.mxu0 %v1444
      %1518 = vmatpush.bf16.msra.mxu0 %v1436
      %1519 = vmatpush.bf16.msra.mxu0 %v1428
      %1520 = vmatmul.bf16.gmra.mxu0 %v1510
      %v1521 = vpop.f32.mrf.mxu0
      %v1522 = vadd.f32 %v1493, %v1521
      %v1523 = vpop.f32.mrf.mxu0
      %1524 = vdwg.mxu0
      %1525 = vmatpush.bf16.msra.mxu0 0
      %1526 = vmatpush.bf16.msra.mxu0 0
      %1527 = vmatpush.bf16.msra.mxu0 0
      %1528 = vmatpush.bf16.msra.mxu0 0
      %1529 = vmatpush.bf16.msra.mxu0 %v1453
      %1530 = vmatpush.bf16.msra.mxu0 %v1445
      %1531 = vmatpush.bf16.msra.mxu0 %v1437
      %1532 = vmatpush.bf16.msra.mxu0 %v1429
      %1533 = vmatmul.bf16.gmra.mxu0 %v1510
      %v1534 = vpop.f32.mrf.mxu0
      %v1535 = vadd.f32 %v1494, %v1534
      %v1536 = vpop.f32.mrf.mxu0
      %1537 = vdwg.mxu0
      %1538 = vmatpush.bf16.msra.mxu0 0
      %1539 = vmatpush.bf16.msra.mxu0 0
      %1540 = vmatpush.bf16.msra.mxu0 0
      %1541 = vmatpush.bf16.msra.mxu0 0
      %1542 = vmatpush.bf16.msra.mxu0 %v1454
      %1543 = vmatpush.bf16.msra.mxu0 %v1446
      %1544 = vmatpush.bf16.msra.mxu0 %v1438
      %1545 = vmatpush.bf16.msra.mxu0 %v1430
      %1546 = vmatmul.bf16.gmra.mxu0 %v1510
      %v1547 = vpop.f32.mrf.mxu0
      %v1548 = vadd.f32 %v1495, %v1547
      %v1549 = vpop.f32.mrf.mxu0
      %1550 = vdwg.mxu0
      %1551 = vmatpush.bf16.msra.mxu0 0
      %1552 = vmatpush.bf16.msra.mxu0 0
      %1553 = vmatpush.bf16.msra.mxu0 0
      %1554 = vmatpush.bf16.msra.mxu0 0
      %1555 = vmatpush.bf16.msra.mxu0 %v1455
      %1556 = vmatpush.bf16.msra.mxu0 %v1447
      %1557 = vmatpush.bf16.msra.mxu0 %v1439
      %1558 = vmatpush.bf16.msra.mxu0 %v1431
      %1559 = vmatmul.bf16.gmra.mxu0 %v1510
      %v1560 = vpop.f32.mrf.mxu0
      %v1561 = vadd.f32 %v1496, %v1560
      %v1562 = vpop.f32.mrf.mxu0
      %1563 = vdwg.mxu0
      %1564 = vmatpush.bf16.msra.mxu0 0
      %1565 = vmatpush.bf16.msra.mxu0 0
      %1566 = vmatpush.bf16.msra.mxu0 0
      %1567 = vmatpush.bf16.msra.mxu0 0
      %1568 = vmatpush.bf16.msra.mxu0 %v1456
      %1569 = vmatpush.bf16.msra.mxu0 %v1448
      %1570 = vmatpush.bf16.msra.mxu0 %v1440
      %1571 = vmatpush.bf16.msra.mxu0 %v1432
      %1572 = vmatmul.bf16.gmra.mxu0 %v1510
      %v1573 = vpop.f32.mrf.mxu0
      %v1574 = vadd.f32 %v1497, %v1573
      %v1575 = vpop.f32.mrf.mxu0
      %1576 = vdwg.mxu0
      %1577 = vmatpush.bf16.msra.mxu0 0
      %1578 = vmatpush.bf16.msra.mxu0 0
      %1579 = vmatpush.bf16.msra.mxu0 0
      %1580 = vmatpush.bf16.msra.mxu0 0
      %1581 = vmatpush.bf16.msra.mxu0 %v1457
      %1582 = vmatpush.bf16.msra.mxu0 %v1449
      %1583 = vmatpush.bf16.msra.mxu0 %v1441
      %1584 = vmatpush.bf16.msra.mxu0 %v1433
      %1585 = vmatmul.bf16.gmra.mxu0 %v1510
      %v1586 = vpop.f32.mrf.mxu0
      %v1587 = vadd.f32 %v1498, %v1586
      %v1588 = vpop.f32.mrf.mxu0
      %1589 = vdwg.mxu0
      %1590 = vmatpush.bf16.msra.mxu0 0
      %1591 = vmatpush.bf16.msra.mxu0 0
      %1592 = vmatpush.bf16.msra.mxu0 0
      %1593 = vmatpush.bf16.msra.mxu0 0
      %1594 = vmatpush.bf16.msra.mxu0 %v1458
      %1595 = vmatpush.bf16.msra.mxu0 %v1450
      %1596 = vmatpush.bf16.msra.mxu0 %v1442
      %1597 = vmatpush.bf16.msra.mxu0 %v1434
      %1598 = vmatmul.bf16.gmra.mxu0 %v1510
      %v1599 = vpop.f32.mrf.mxu0
      %v1600 = vadd.f32 %v1499, %v1599
      %v1601 = vpop.f32.mrf.mxu0
      %1602 = vdwg.mxu0
      %1603 = vmatpush.bf16.msra.mxu0 0
      %1604 = vmatpush.bf16.msra.mxu0 0
      %1605 = vmatpush.bf16.msra.mxu0 0
      %1606 = vmatpush.bf16.msra.mxu0 0
      %1607 = vmatpush.bf16.msra.mxu0 %v1459
      %1608 = vmatpush.bf16.msra.mxu0 %v1451
      %1609 = vmatpush.bf16.msra.mxu0 %v1443
      %1610 = vmatpush.bf16.msra.mxu0 %v1435
      %1611 = vmatmul.bf16.gmra.mxu0 %v1510
      %v1612 = vpop.f32.mrf.mxu0
      %v1613 = vadd.f32 %v1500, %v1612
      %v1614 = vpop.f32.mrf.mxu0
      %1615 = vdwg.mxu0
      %v1616 = vmax.f32 %v1522, 0.0
      %v1617 = vmax.f32 %v1535, 0.0
      %v1618 = vmax.f32 %v1548, 0.0
      %v1619 = vmax.f32 %v1561, 0.0
      %v1620 = vmax.f32 %v1574, 0.0
      %v1621 = vmax.f32 %v1587, 0.0
      %v1622 = vmax.f32 %v1600, 0.0
      %v1623 = vmax.f32 %v1613, 0.0
      %v1624 = vpack.c.bf16 %v1616, %v1616
      %v1625 = vpack.c.bf16 %v1617, %v1617
      %v1626 = vpack.c.bf16 %v1618, %v1618
      %v1627 = vpack.c.bf16 %v1619, %v1619
      %v1628 = vpack.c.bf16 %v1620, %v1620
      %v1629 = vpack.c.bf16 %v1621, %v1621
      %v1630 = vpack.c.bf16 %v1622, %v1622
      %v1631 = vpack.c.bf16 %v1623, %v1623
      %v1632 = vld [vmem:[%s7] sm:$0xf]
      %v1633 = vld [vmem:[%s7 + $0x4] sm:$0xf]
      %v1634 = vld [vmem:[%s7 + $0x8] sm:$0xf]
      %v1635 = vld [vmem:[%s7 + $0xc] sm:$0xf]
      %v1636 = vld [vmem:[%s7 + $0x10] sm:$0xf]
      %v1637 = vld [vmem:[%s7 + $0x14] sm:$0xf]
      %v1638 = vld [vmem:[%s7 + $0x18] sm:$0xf]
      %v1639 = vld [vmem:[%s7 + $0x1c] sm:$0xf]
      %v1640 = vld [vmem:[%s7 + $0x20] sm:$0xf]
      %v1641 = vld [vmem:[%s7 + $0x24] sm:$0xf]
      %v1642 = vld [vmem:[%s7 + $0x28] sm:$0xf]
      %v1643 = vld [vmem:[%s7 + $0x2c] sm:$0xf]
      %v1644 = vld [vmem:[%s7 + $0x30] sm:$0xf]
      %v1645 = vld [vmem:[%s7 + $0x34] sm:$0xf]
      %v1646 = vld [vmem:[%s7 + $0x38] sm:$0xf]
      %v1647 = vld [vmem:[%s7 + $0x3c] sm:$0xf]
      %v1648 = vld [vmem:[%s7 + $0x40] sm:$0xf]
      %v1649 = vld [vmem:[%s7 + $0x44] sm:$0xf]
      %v1650 = vld [vmem:[%s7 + $0x48] sm:$0xf]
      %v1651 = vld [vmem:[%s7 + $0x4c] sm:$0xf]
      %v1652 = vld [vmem:[%s7 + $0x50] sm:$0xf]
      %v1653 = vld [vmem:[%s7 + $0x54] sm:$0xf]
      %v1654 = vld [vmem:[%s7 + $0x58] sm:$0xf]
      %v1655 = vld [vmem:[%s7 + $0x5c] sm:$0xf]
      %v1656 = vld [vmem:[%s7 + $0x60] sm:$0xf]
      %v1657 = vld [vmem:[%s7 + $0x64] sm:$0xf]
      %v1658 = vld [vmem:[%s7 + $0x68] sm:$0xf]
      %v1659 = vld [vmem:[%s7 + $0x6c] sm:$0xf]
      %v1660 = vld [vmem:[%s7 + $0x70] sm:$0xf]
      %v1661 = vld [vmem:[%s7 + $0x74] sm:$0xf]
      %v1662 = vld [vmem:[%s7 + $0x78] sm:$0xf]
      %v1663 = vld [vmem:[%s7 + $0x7c] sm:$0xf]
      %v1664 = vld [vmem:[%s7 + $0x80] sm:$0xf]
      %v1665 = vld [vmem:[%s7 + $0x84] sm:$0xf]
      %v1666 = vld [vmem:[%s7 + $0x88] sm:$0xf]
      %v1667 = vld [vmem:[%s7 + $0x8c] sm:$0xf]
      %v1668 = vld [vmem:[%s7 + $0x90] sm:$0xf]
      %v1669 = vld [vmem:[%s7 + $0x94] sm:$0xf]
      %v1670 = vld [vmem:[%s7 + $0x98] sm:$0xf]
      %v1671 = vld [vmem:[%s7 + $0x9c] sm:$0xf]
      %v1672 = vld [vmem:[%s7 + $0xa0] sm:$0xf]
      %v1673 = vld [vmem:[%s7 + $0xa4] sm:$0xf]
      %v1674 = vld [vmem:[%s7 + $0xa8] sm:$0xf]
      %v1675 = vld [vmem:[%s7 + $0xac] sm:$0xf]
      %v1676 = vld [vmem:[%s7 + $0xb0] sm:$0xf]
      %v1677 = vld [vmem:[%s7 + $0xb4] sm:$0xf]
      %v1678 = vld [vmem:[%s7 + $0xb8] sm:$0xf]
      %v1679 = vld [vmem:[%s7 + $0xbc] sm:$0xf]
      %v1680 = vld [vmem:[%s7 + $0xc0] sm:$0xf]
      %v1681 = vld [vmem:[%s7 + $0xc4] sm:$0xf]
      %v1682 = vld [vmem:[%s7 + $0xc8] sm:$0xf]
      %v1683 = vld [vmem:[%s7 + $0xcc] sm:$0xf]
      %v1684 = vld [vmem:[%s7 + $0xd0] sm:$0xf]
      %v1685 = vld [vmem:[%s7 + $0xd4] sm:$0xf]
      %v1686 = vld [vmem:[%s7 + $0xd8] sm:$0xf]
      %v1687 = vld [vmem:[%s7 + $0xdc] sm:$0xf]
      %v1688 = vld [vmem:[%s7 + $0xe0] sm:$0xf]
      %v1689 = vld [vmem:[%s7 + $0xe4] sm:$0xf]
      %v1690 = vld [vmem:[%s7 + $0xe8] sm:$0xf]
      %v1691 = vld [vmem:[%s7 + $0xec] sm:$0xf]
      %v1692 = vld [vmem:[%s7 + $0xf0] sm:$0xf]
      %v1693 = vld [vmem:[%s7 + $0xf4] sm:$0xf]
      %v1694 = vld [vmem:[%s7 + $0xf8] sm:$0xf]
      %v1695 = vld [vmem:[%s7 + $0xfc] sm:$0xf]
      %v1696 = vld [vmem:[%s7 + $0x100] sm:$0xf]
      %v1697 = vld [vmem:[%s7 + $0x104] sm:$0xf]
      %v1698 = vld [vmem:[%s7 + $0x108] sm:$0xf]
      %v1699 = vld [vmem:[%s7 + $0x10c] sm:$0xf]
      %v1700 = vld [vmem:[%s7 + $0x110] sm:$0xf]
      %v1701 = vld [vmem:[%s7 + $0x114] sm:$0xf]
      %v1702 = vld [vmem:[%s7 + $0x118] sm:$0xf]
      %v1703 = vld [vmem:[%s7 + $0x11c] sm:$0xf]
      %v1704 = vld [vmem:[%s7 + $0x120] sm:$0xf]
      %v1705 = vld [vmem:[%s7 + $0x124] sm:$0xf]
      %v1706 = vld [vmem:[%s7 + $0x128] sm:$0xf]
      %v1707 = vld [vmem:[%s7 + $0x12c] sm:$0xf]
      %v1708 = vld [vmem:[%s7 + $0x130] sm:$0xf]
      %v1709 = vld [vmem:[%s7 + $0x134] sm:$0xf]
      %v1710 = vld [vmem:[%s7 + $0x138] sm:$0xf]
      %v1711 = vld [vmem:[%s7 + $0x13c] sm:$0xf]
      %v1712 = vld [vmem:[%s7 + $0x140] sm:$0xf]
      %v1713 = vld [vmem:[%s7 + $0x144] sm:$0xf]
      %v1714 = vld [vmem:[%s7 + $0x148] sm:$0xf]
      %v1715 = vld [vmem:[%s7 + $0x14c] sm:$0xf]
      %v1716 = vld [vmem:[%s7 + $0x150] sm:$0xf]
      %v1717 = vld [vmem:[%s7 + $0x154] sm:$0xf]
      %v1718 = vld [vmem:[%s7 + $0x158] sm:$0xf]
      %v1719 = vld [vmem:[%s7 + $0x15c] sm:$0xf]
      %v1720 = vld [vmem:[%s7 + $0x160] sm:$0xf]
      %v1721 = vld [vmem:[%s7 + $0x164] sm:$0xf]
      %v1722 = vld [vmem:[%s7 + $0x168] sm:$0xf]
      %v1723 = vld [vmem:[%s7 + $0x16c] sm:$0xf]
      %v1724 = vld [vmem:[%s7 + $0x170] sm:$0xf]
      %v1725 = vld [vmem:[%s7 + $0x174] sm:$0xf]
      %v1726 = vld [vmem:[%s7 + $0x178] sm:$0xf]
      %v1727 = vld [vmem:[%s7 + $0x17c] sm:$0xf]
      %v1728 = vld [vmem:[%s7 + $0x180] sm:$0xf]
      %v1729 = vld [vmem:[%s7 + $0x184] sm:$0xf]
      %v1730 = vld [vmem:[%s7 + $0x188] sm:$0xf]
      %v1731 = vld [vmem:[%s7 + $0x18c] sm:$0xf]
      %v1732 = vld [vmem:[%s7 + $0x190] sm:$0xf]
      %v1733 = vld [vmem:[%s7 + $0x194] sm:$0xf]
      %v1734 = vld [vmem:[%s7 + $0x198] sm:$0xf]
      %v1735 = vld [vmem:[%s7 + $0x19c] sm:$0xf]
      %v1736 = vld [vmem:[%s7 + $0x1a0] sm:$0xf]
      %v1737 = vld [vmem:[%s7 + $0x1a4] sm:$0xf]
      %v1738 = vld [vmem:[%s7 + $0x1a8] sm:$0xf]
      %v1739 = vld [vmem:[%s7 + $0x1ac] sm:$0xf]
      %v1740 = vld [vmem:[%s7 + $0x1b0] sm:$0xf]
      %v1741 = vld [vmem:[%s7 + $0x1b4] sm:$0xf]
      %v1742 = vld [vmem:[%s7 + $0x1b8] sm:$0xf]
      %v1743 = vld [vmem:[%s7 + $0x1bc] sm:$0xf]
      %v1744 = vld [vmem:[%s7 + $0x1c0] sm:$0xf]
      %v1745 = vld [vmem:[%s7 + $0x1c4] sm:$0xf]
      %v1746 = vld [vmem:[%s7 + $0x1c8] sm:$0xf]
      %v1747 = vld [vmem:[%s7 + $0x1cc] sm:$0xf]
      %v1748 = vld [vmem:[%s7 + $0x1d0] sm:$0xf]
      %v1749 = vld [vmem:[%s7 + $0x1d4] sm:$0xf]
      %v1750 = vld [vmem:[%s7 + $0x1d8] sm:$0xf]
      %v1751 = vld [vmem:[%s7 + $0x1dc] sm:$0xf]
      %v1752 = vld [vmem:[%s7 + $0x1e0] sm:$0xf]
      %v1753 = vld [vmem:[%s7 + $0x1e4] sm:$0xf]
      %v1754 = vld [vmem:[%s7 + $0x1e8] sm:$0xf]
      %v1755 = vld [vmem:[%s7 + $0x1ec] sm:$0xf]
      %v1756 = vld [vmem:[%s7 + $0x1f0] sm:$0xf]
      %v1757 = vld [vmem:[%s7 + $0x1f4] sm:$0xf]
      %v1758 = vld [vmem:[%s7 + $0x1f8] sm:$0xf]
      %v1759 = vld [vmem:[%s7 + $0x1fc] sm:$0xf]
      %v1760 = vld [vmem:[%s8] sm:$0x1]
      %v1889 = vunpack.c.l.b16 %v1632
      %v1890 = vunpack.c.l.b16 %v1633
      %v1891 = vunpack.c.l.b16 %v1634
      %v1892 = vunpack.c.l.b16 %v1635
      %v1893 = vunpack.c.l.b16 %v1636
      %v1894 = vunpack.c.l.b16 %v1637
      %v1895 = vunpack.c.l.b16 %v1638
      %v1896 = vunpack.c.l.b16 %v1639
      %v1897 = vunpack.c.l.b16 %v1640
      %v1898 = vunpack.c.l.b16 %v1641
      %v1899 = vunpack.c.l.b16 %v1642
      %v1900 = vunpack.c.l.b16 %v1643
      %v1901 = vunpack.c.l.b16 %v1644
      %v1902 = vunpack.c.l.b16 %v1645
      %v1903 = vunpack.c.l.b16 %v1646
      %v1904 = vunpack.c.l.b16 %v1647
      %v1905 = vunpack.c.l.b16 %v1648
      %v1906 = vunpack.c.l.b16 %v1649
      %v1907 = vunpack.c.l.b16 %v1650
      %v1908 = vunpack.c.l.b16 %v1651
      %v1909 = vunpack.c.l.b16 %v1652
      %v1910 = vunpack.c.l.b16 %v1653
      %v1911 = vunpack.c.l.b16 %v1654
      %v1912 = vunpack.c.l.b16 %v1655
      %v1913 = vunpack.c.l.b16 %v1656
      %v1914 = vunpack.c.l.b16 %v1657
      %v1915 = vunpack.c.l.b16 %v1658
      %v1916 = vunpack.c.l.b16 %v1659
      %v1917 = vunpack.c.l.b16 %v1660
      %v1918 = vunpack.c.l.b16 %v1661
      %v1919 = vunpack.c.l.b16 %v1662
      %v1920 = vunpack.c.l.b16 %v1663
      %v1921 = vunpack.c.l.b16 %v1664
      %v1922 = vunpack.c.l.b16 %v1665
      %v1923 = vunpack.c.l.b16 %v1666
      %v1924 = vunpack.c.l.b16 %v1667
      %v1925 = vunpack.c.l.b16 %v1668
      %v1926 = vunpack.c.l.b16 %v1669
      %v1927 = vunpack.c.l.b16 %v1670
      %v1928 = vunpack.c.l.b16 %v1671
      %v1929 = vunpack.c.l.b16 %v1672
      %v1930 = vunpack.c.l.b16 %v1673
      %v1931 = vunpack.c.l.b16 %v1674
      %v1932 = vunpack.c.l.b16 %v1675
      %v1933 = vunpack.c.l.b16 %v1676
      %v1934 = vunpack.c.l.b16 %v1677
      %v1935 = vunpack.c.l.b16 %v1678
      %v1936 = vunpack.c.l.b16 %v1679
      %v1937 = vunpack.c.l.b16 %v1680
      %v1938 = vunpack.c.l.b16 %v1681
      %v1939 = vunpack.c.l.b16 %v1682
      %v1940 = vunpack.c.l.b16 %v1683
      %v1941 = vunpack.c.l.b16 %v1684
      %v1942 = vunpack.c.l.b16 %v1685
      %v1943 = vunpack.c.l.b16 %v1686
      %v1944 = vunpack.c.l.b16 %v1687
      %v1945 = vunpack.c.l.b16 %v1688
      %v1946 = vunpack.c.l.b16 %v1689
      %v1947 = vunpack.c.l.b16 %v1690
      %v1948 = vunpack.c.l.b16 %v1691
      %v1949 = vunpack.c.l.b16 %v1692
      %v1950 = vunpack.c.l.b16 %v1693
      %v1951 = vunpack.c.l.b16 %v1694
      %v1952 = vunpack.c.l.b16 %v1695
      %v1953 = vunpack.c.l.b16 %v1696
      %v1954 = vunpack.c.l.b16 %v1697
      %v1955 = vunpack.c.l.b16 %v1698
      %v1956 = vunpack.c.l.b16 %v1699
      %v1957 = vunpack.c.l.b16 %v1700
      %v1958 = vunpack.c.l.b16 %v1701
      %v1959 = vunpack.c.l.b16 %v1702
      %v1960 = vunpack.c.l.b16 %v1703
      %v1961 = vunpack.c.l.b16 %v1704
      %v1962 = vunpack.c.l.b16 %v1705
      %v1963 = vunpack.c.l.b16 %v1706
      %v1964 = vunpack.c.l.b16 %v1707
      %v1965 = vunpack.c.l.b16 %v1708
      %v1966 = vunpack.c.l.b16 %v1709
      %v1967 = vunpack.c.l.b16 %v1710
      %v1968 = vunpack.c.l.b16 %v1711
      %v1969 = vunpack.c.l.b16 %v1712
      %v1970 = vunpack.c.l.b16 %v1713
      %v1971 = vunpack.c.l.b16 %v1714
      %v1972 = vunpack.c.l.b16 %v1715
      %v1973 = vunpack.c.l.b16 %v1716
      %v1974 = vunpack.c.l.b16 %v1717
      %v1975 = vunpack.c.l.b16 %v1718
      %v1976 = vunpack.c.l.b16 %v1719
      %v1977 = vunpack.c.l.b16 %v1720
      %v1978 = vunpack.c.l.b16 %v1721
      %v1979 = vunpack.c.l.b16 %v1722
      %v1980 = vunpack.c.l.b16 %v1723
      %v1981 = vunpack.c.l.b16 %v1724
      %v1982 = vunpack.c.l.b16 %v1725
      %v1983 = vunpack.c.l.b16 %v1726
      %v1984 = vunpack.c.l.b16 %v1727
      %v1985 = vunpack.c.l.b16 %v1728
      %v1986 = vunpack.c.l.b16 %v1729
      %v1987 = vunpack.c.l.b16 %v1730
      %v1988 = vunpack.c.l.b16 %v1731
      %v1989 = vunpack.c.l.b16 %v1732
      %v1990 = vunpack.c.l.b16 %v1733
      %v1991 = vunpack.c.l.b16 %v1734
      %v1992 = vunpack.c.l.b16 %v1735
      %v1993 = vunpack.c.l.b16 %v1736
      %v1994 = vunpack.c.l.b16 %v1737
      %v1995 = vunpack.c.l.b16 %v1738
      %v1996 = vunpack.c.l.b16 %v1739
      %v1997 = vunpack.c.l.b16 %v1740
      %v1998 = vunpack.c.l.b16 %v1741
      %v1999 = vunpack.c.l.b16 %v1742
      %v2000 = vunpack.c.l.b16 %v1743
      %v2001 = vunpack.c.l.b16 %v1744
      %v2002 = vunpack.c.l.b16 %v1745
      %v2003 = vunpack.c.l.b16 %v1746
      %v2004 = vunpack.c.l.b16 %v1747
      %v2005 = vunpack.c.l.b16 %v1748
      %v2006 = vunpack.c.l.b16 %v1749
      %v2007 = vunpack.c.l.b16 %v1750
      %v2008 = vunpack.c.l.b16 %v1751
      %v2009 = vunpack.c.l.b16 %v1752
      %v2010 = vunpack.c.l.b16 %v1753
      %v2011 = vunpack.c.l.b16 %v1754
      %v2012 = vunpack.c.l.b16 %v1755
      %v2013 = vunpack.c.l.b16 %v1756
      %v2014 = vunpack.c.l.b16 %v1757
      %v2015 = vunpack.c.l.b16 %v1758
      %v2016 = vunpack.c.l.b16 %v1759
      %v2017 = vpack.c.b16 %v1890, %v1889
      %v2018 = vpack.c.b16 %v1892, %v1891
      %v2019 = vpack.c.b16 %v1894, %v1893
      %v2020 = vpack.c.b16 %v1896, %v1895
      %v2021 = vpack.c.b16 %v1898, %v1897
      %v2022 = vpack.c.b16 %v1900, %v1899
      %v2023 = vpack.c.b16 %v1902, %v1901
      %v2024 = vpack.c.b16 %v1904, %v1903
      %v2025 = vpack.c.b16 %v1906, %v1905
      %v2026 = vpack.c.b16 %v1908, %v1907
      %v2027 = vpack.c.b16 %v1910, %v1909
      %v2028 = vpack.c.b16 %v1912, %v1911
      %v2029 = vpack.c.b16 %v1914, %v1913
      %v2030 = vpack.c.b16 %v1916, %v1915
      %v2031 = vpack.c.b16 %v1918, %v1917
      %v2032 = vpack.c.b16 %v1920, %v1919
      %v2033 = vpack.c.b16 %v1922, %v1921
      %v2034 = vpack.c.b16 %v1924, %v1923
      %v2035 = vpack.c.b16 %v1926, %v1925
      %v2036 = vpack.c.b16 %v1928, %v1927
      %v2037 = vpack.c.b16 %v1930, %v1929
      %v2038 = vpack.c.b16 %v1932, %v1931
      %v2039 = vpack.c.b16 %v1934, %v1933
      %v2040 = vpack.c.b16 %v1936, %v1935
      %v2041 = vpack.c.b16 %v1938, %v1937
      %v2042 = vpack.c.b16 %v1940, %v1939
      %v2043 = vpack.c.b16 %v1942, %v1941
      %v2044 = vpack.c.b16 %v1944, %v1943
      %v2045 = vpack.c.b16 %v1946, %v1945
      %v2046 = vpack.c.b16 %v1948, %v1947
      %v2047 = vpack.c.b16 %v1950, %v1949
      %v2048 = vpack.c.b16 %v1952, %v1951
      %v2049 = vpack.c.b16 %v1954, %v1953
      %v2050 = vpack.c.b16 %v1956, %v1955
      %v2051 = vpack.c.b16 %v1958, %v1957
      %v2052 = vpack.c.b16 %v1960, %v1959
      %v2053 = vpack.c.b16 %v1962, %v1961
      %v2054 = vpack.c.b16 %v1964, %v1963
      %v2055 = vpack.c.b16 %v1966, %v1965
      %v2056 = vpack.c.b16 %v1968, %v1967
      %v2057 = vpack.c.b16 %v1970, %v1969
      %v2058 = vpack.c.b16 %v1972, %v1971
      %v2059 = vpack.c.b16 %v1974, %v1973
      %v2060 = vpack.c.b16 %v1976, %v1975
      %v2061 = vpack.c.b16 %v1978, %v1977
      %v2062 = vpack.c.b16 %v1980, %v1979
      %v2063 = vpack.c.b16 %v1982, %v1981
      %v2064 = vpack.c.b16 %v1984, %v1983
      %v2065 = vpack.c.b16 %v1986, %v1985
      %v2066 = vpack.c.b16 %v1988, %v1987
      %v2067 = vpack.c.b16 %v1990, %v1989
      %v2068 = vpack.c.b16 %v1992, %v1991
      %v2069 = vpack.c.b16 %v1994, %v1993
      %v2070 = vpack.c.b16 %v1996, %v1995
      %v2071 = vpack.c.b16 %v1998, %v1997
      %v2072 = vpack.c.b16 %v2000, %v1999
      %v2073 = vpack.c.b16 %v2002, %v2001
      %v2074 = vpack.c.b16 %v2004, %v2003
      %v2075 = vpack.c.b16 %v2006, %v2005
      %v2076 = vpack.c.b16 %v2008, %v2007
      %v2077 = vpack.c.b16 %v2010, %v2009
      %v2078 = vpack.c.b16 %v2012, %v2011
      %v2079 = vpack.c.b16 %v2014, %v2013
      %v2080 = vpack.c.b16 %v2016, %v2015
      %2145 = vmatpush.bf16.msra.mxu0 %v2024
      %2146 = vmatpush.bf16.msra.mxu0 %v2023
      %2147 = vmatpush.bf16.msra.mxu0 %v2022
      %2148 = vmatpush.bf16.msra.mxu0 %v2021
      %2149 = vmatpush.bf16.msra.mxu0 %v2020
      %2150 = vmatpush.bf16.msra.mxu0 %v2019
      %2151 = vmatpush.bf16.msra.mxu0 %v2018
      %2152 = vmatpush.bf16.msra.mxu0 %v2017
      %2153 = vmatmul.bf16.gmra.mxu0 %v1624
      %v2154 = vpop.f32.mrf.mxu0
      %v2155 = vadd.f32 %v1760, %v2154
      %v2156 = vpop.f32.mrf.mxu0
      %2157 = vdwg.mxu0
      %2158 = vmatpush.bf16.msra.mxu0 %v2032
      %2159 = vmatpush.bf16.msra.mxu0 %v2031
      %2160 = vmatpush.bf16.msra.mxu0 %v2030
      %2161 = vmatpush.bf16.msra.mxu0 %v2029
      %2162 = vmatpush.bf16.msra.mxu0 %v2028
      %2163 = vmatpush.bf16.msra.mxu0 %v2027
      %2164 = vmatpush.bf16.msra.mxu0 %v2026
      %2165 = vmatpush.bf16.msra.mxu0 %v2025
      %2166 = vmatmul.bf16.gmra.mxu0 %v1625
      %v2167 = vpop.f32.mrf.mxu0
      %v2168 = vadd.f32 %v2155, %v2167
      %v2169 = vpop.f32.mrf.mxu0
      %2170 = vdwg.mxu0
      %2171 = vmatpush.bf16.msra.mxu0 %v2040
      %2172 = vmatpush.bf16.msra.mxu0 %v2039
      %2173 = vmatpush.bf16.msra.mxu0 %v2038
      %2174 = vmatpush.bf16.msra.mxu0 %v2037
      %2175 = vmatpush.bf16.msra.mxu0 %v2036
      %2176 = vmatpush.bf16.msra.mxu0 %v2035
      %2177 = vmatpush.bf16.msra.mxu0 %v2034
      %2178 = vmatpush.bf16.msra.mxu0 %v2033
      %2179 = vmatmul.bf16.gmra.mxu0 %v1626
      %v2180 = vpop.f32.mrf.mxu0
      %v2181 = vadd.f32 %v2168, %v2180
      %v2182 = vpop.f32.mrf.mxu0
      %2183 = vdwg.mxu0
      %2184 = vmatpush.bf16.msra.mxu0 %v2048
      %2185 = vmatpush.bf16.msra.mxu0 %v2047
      %2186 = vmatpush.bf16.msra.mxu0 %v2046
      %2187 = vmatpush.bf16.msra.mxu0 %v2045
      %2188 = vmatpush.bf16.msra.mxu0 %v2044
      %2189 = vmatpush.bf16.msra.mxu0 %v2043
      %2190 = vmatpush.bf16.msra.mxu0 %v2042
      %2191 = vmatpush.bf16.msra.mxu0 %v2041
      %2192 = vmatmul.bf16.gmra.mxu0 %v1627
      %v2193 = vpop.f32.mrf.mxu0
      %v2194 = vadd.f32 %v2181, %v2193
      %v2195 = vpop.f32.mrf.mxu0
      %2196 = vdwg.mxu0
      %2197 = vmatpush.bf16.msra.mxu0 %v2056
      %2198 = vmatpush.bf16.msra.mxu0 %v2055
      %2199 = vmatpush.bf16.msra.mxu0 %v2054
      %2200 = vmatpush.bf16.msra.mxu0 %v2053
      %2201 = vmatpush.bf16.msra.mxu0 %v2052
      %2202 = vmatpush.bf16.msra.mxu0 %v2051
      %2203 = vmatpush.bf16.msra.mxu0 %v2050
      %2204 = vmatpush.bf16.msra.mxu0 %v2049
      %2205 = vmatmul.bf16.gmra.mxu0 %v1628
      %v2206 = vpop.f32.mrf.mxu0
      %v2207 = vadd.f32 %v2194, %v2206
      %v2208 = vpop.f32.mrf.mxu0
      %2209 = vdwg.mxu0
      %2210 = vmatpush.bf16.msra.mxu0 %v2064
      %2211 = vmatpush.bf16.msra.mxu0 %v2063
      %2212 = vmatpush.bf16.msra.mxu0 %v2062
      %2213 = vmatpush.bf16.msra.mxu0 %v2061
      %2214 = vmatpush.bf16.msra.mxu0 %v2060
      %2215 = vmatpush.bf16.msra.mxu0 %v2059
      %2216 = vmatpush.bf16.msra.mxu0 %v2058
      %2217 = vmatpush.bf16.msra.mxu0 %v2057
      %2218 = vmatmul.bf16.gmra.mxu0 %v1629
      %v2219 = vpop.f32.mrf.mxu0
      %v2220 = vadd.f32 %v2207, %v2219
      %v2221 = vpop.f32.mrf.mxu0
      %2222 = vdwg.mxu0
      %2223 = vmatpush.bf16.msra.mxu0 %v2072
      %2224 = vmatpush.bf16.msra.mxu0 %v2071
      %2225 = vmatpush.bf16.msra.mxu0 %v2070
      %2226 = vmatpush.bf16.msra.mxu0 %v2069
      %2227 = vmatpush.bf16.msra.mxu0 %v2068
      %2228 = vmatpush.bf16.msra.mxu0 %v2067
      %2229 = vmatpush.bf16.msra.mxu0 %v2066
      %2230 = vmatpush.bf16.msra.mxu0 %v2065
      %2231 = vmatmul.bf16.gmra.mxu0 %v1630
      %v2232 = vpop.f32.mrf.mxu0
      %v2233 = vadd.f32 %v2220, %v2232
      %v2234 = vpop.f32.mrf.mxu0
      %2235 = vdwg.mxu0
      %2236 = vmatpush.bf16.msra.mxu0 %v2080
      %2237 = vmatpush.bf16.msra.mxu0 %v2079
      %2238 = vmatpush.bf16.msra.mxu0 %v2078
      %2239 = vmatpush.bf16.msra.mxu0 %v2077
      %2240 = vmatpush.bf16.msra.mxu0 %v2076
      %2241 = vmatpush.bf16.msra.mxu0 %v2075
      %2242 = vmatpush.bf16.msra.mxu0 %v2074
      %2243 = vmatpush.bf16.msra.mxu0 %v2073
      %2244 = vmatmul.bf16.gmra.mxu0 %v1631
      %v2245 = vpop.f32.mrf.mxu0
      %v2246 = vadd.f32 %v2233, %v2245
      %v2247 = vpop.f32.mrf.mxu0
      %2248 = vdwg.mxu0
      %2249 = vst [vmem:[%s328] sm:$0x1] %v2246
      %p2250 = scmp.lt.s32.totalorder %s20, 1
      %s2251 = scalar_select %p2250, %s20, 1
      %s2252 = scalar_lea.vmem %s9, %s2251
      // Predicated region
      $region57: #{atari_a2c_forward.3} parent=55 // pred_check
        %p2253 = pneg %p232
      $region58: #{atari_a2c_forward.3} parent=55 // pred_check_branch
        %2255 = sbr.rel (%p2253) target = $region60
      $region59: #{atari_a2c_forward.3} parent=55 // pred_region
        _
      $region60: #{atari_a2c_forward.3} parent=55 // pred_fallthru
        _
    $region56: #{atari_a2c_forward.3} parent=5 // pred_fallthru
      _
    %p2256 = scmp.le.s32.totalorder 2, %s15
    // Predicated region
    $region61: #{atari_a2c_forward.3} parent=5 // pred_check
      %p2257 = pneg %p2256
    $region62: #{atari_a2c_forward.3} parent=5 // pred_check_branch
      %2259 = sbr.rel (%p2257) target = $region64
    $region63: #{atari_a2c_forward.3} parent=5 // pred_region
      %s2260 = ssub.s32 %s15, 2
      // Predicated region
      $region65: #{atari_a2c_forward.3} parent=63 // pred_check
        %p2261 = pneg %p238
      $region66: #{atari_a2c_forward.3} parent=63 // pred_check_branch
        %2263 = sbr.rel (%p2261) target = $region68
      $region67: #{atari_a2c_forward.3} parent=63 // pred_region
        %p2264 = scmp.lt.s32.totalorder %s21, 1
        %s2265 = scalar_select %p2264, %s21, 1
        %s2266 = scalar_lea.vmem %s9, %s2265
      $region68: #{atari_a2c_forward.3} parent=63 // pred_fallthru
        _
    $region64: #{atari_a2c_forward.3} parent=5 // pred_fallthru
      _
  $region6: #{atari_a2c_forward.3} parent=0 // loop_footer
    %s19 = sadd.s32 1, %s15
  $region7: #{atari_a2c_forward.3} parent=0 // loop_footer_branch
    %14 = sbr.rel target = $region3
  $region8: #{atari_a2c_forward.3} parent=0 // loop_exit
    _

</llo_original>
